<compile_context>
chip_gen: v7x
topology: tpu7x:2x2x1
jax: 0.10.0
libtpu: 0.0.40
codegen_flags: <defaults>
</compile_context>

<pallas_src>
import functools
import math

import jax
import jax.numpy as jnp
from jax import lax
from jax.experimental import pallas as pl
from jax.experimental.pallas import tpu as pltpu


def _layernorm(x, gamma, beta, eps):
    mu = jnp.mean(x, axis=-1, keepdims=True)
    var = jnp.mean((x - mu) * (x - mu), axis=-1, keepdims=True)
    return (x - mu) * lax.rsqrt(var + eps) * gamma + beta


def encoder_layer_kernel(x_ref, pos_ref,
                         wqk_ref, bqk_ref, wv_ref, bv_ref, wo_ref, bo_ref,
                         g1_ref, be1_ref,
                         w1_ref, b1_ref, w2_ref, b2_ref,
                         g2_ref, be2_ref,
                         o_ref, *, nhead, eps):
    """One batch element per grid step.

    x_ref  : (1, S, D)   input tokens
    pos_ref: (S, D)      positional embedding (added to q/k only)
    wqk_ref: (D, 2D)     fused Q|K projection weights
    wv_ref : (D, D)      V projection
    wo_ref : (D, D)      attention output projection
    w1_ref : (D, F), w2_ref: (F, D)   feed-forward weights
    g*/be* : (1, D)      LayerNorm gamma/beta
    o_ref  : (1, S, D)
    """
    S, D = x_ref.shape[1], x_ref.shape[2]
    hd = D // nhead
    scale = 1.0 / math.sqrt(hd)

    x = x_ref[0]                      # (S, D)
    xp = x + pos_ref[...]             # q = k = src + pos_embed

    # Fused Q/K projection: single (S, D) @ (D, 2D) MXU matmul.
    qk = jnp.dot(xp, wqk_ref[...], preferred_element_type=jnp.float32) + bqk_ref[...]
    q = qk[:, :D]
    k = qk[:, D:]
    v = jnp.dot(x, wv_ref[...], preferred_element_type=jnp.float32) + bv_ref[...]

    # Per-head scaled-dot-product attention (static loop, nhead is small).
    heads = []
    for h in range(nhead):
        sl = slice(h * hd, (h + 1) * hd)
        qh, kh, vh = q[:, sl], k[:, sl], v[:, sl]
        # scores = qh @ kh^T  (contract last dims of both; no explicit transpose)
        s = lax.dot_general(qh, kh, (((1,), (1,)), ((), ())),
                            preferred_element_type=jnp.float32) * scale    # (S, S)
        s = s - jnp.max(s, axis=-1, keepdims=True)
        p = jnp.exp(s)
        p = p / jnp.sum(p, axis=-1, keepdims=True)
        heads.append(jnp.dot(p, vh, preferred_element_type=jnp.float32))   # (S, hd)
    attn = jnp.concatenate(heads, axis=-1)                                 # (S, D)
    attn = jnp.dot(attn, wo_ref[...], preferred_element_type=jnp.float32) + bo_ref[...]

    # Residual + post-norm 1.
    y = _layernorm(x + attn, g1_ref[...], be1_ref[...], eps)

    # Feed-forward: linear1 -> ReLU -> linear2.
    hact = jnp.maximum(
        jnp.dot(y, w1_ref[...], preferred_element_type=jnp.float32) + b1_ref[...], 0.0)
    f = jnp.dot(hact, w2_ref[...], preferred_element_type=jnp.float32) + b2_ref[...]

    # Residual + post-norm 2.
    o_ref[...] = _layernorm(y + f, g2_ref[...], be2_ref[...], eps).reshape(1, S, D)


def _const_spec(arr):
    zeros = (0,) * arr.ndim
    return pl.BlockSpec(arr.shape, lambda b, z=zeros: z)


def transformer_encoder_layer(x, pos, params, *, nhead, eps=1e-5):
    """x: (B, S, D) float32, pos: (S, D). Returns (B, S, D)."""
    (wqk, bqk, wv, bv, wo, bo, g1, be1, w1, b1, w2, b2, g2, be2) = params
    B, S, D = x.shape

    kernel = functools.partial(encoder_layer_kernel, nhead=nhead, eps=eps)
    in_specs = [
        pl.BlockSpec((1, S, D), lambda b: (b, 0, 0)),   # per-batch token slab
        _const_spec(pos),
        _const_spec(wqk), _const_spec(bqk),
        _const_spec(wv), _const_spec(bv),
        _const_spec(wo), _const_spec(bo),
        _const_spec(g1), _const_spec(be1),
        _const_spec(w1), _const_spec(b1),
        _const_spec(w2), _const_spec(b2),
        _const_spec(g2), _const_spec(be2),
    ]

    return pl.pallas_call(
        kernel,
        out_shape=jax.ShapeDtypeStruct((B, S, D), jnp.float32),
        grid=(B,),
        in_specs=in_specs,
        out_specs=pl.BlockSpec((1, S, D), lambda b: (b, 0, 0)),
        compiler_params=pltpu.CompilerParams(dimension_semantics=("parallel",)),
    )(x, pos, wqk, bqk, wv, bv, wo, bo, g1, be1, w1, b1, w2, b2, g2, be2)


def make_params(key, d_model, dim_feedforward):
    """Deterministic synthetic parameters (Q/K weights pre-fused into one matrix)."""
    ks = jax.random.split(key, 15)
    s = 0.1
    f32 = jnp.float32
    wq = s * jax.random.normal(ks[0], (d_model, d_model), f32)
    wk = s * jax.random.normal(ks[1], (d_model, d_model), f32)
    wqk = jnp.concatenate([wq, wk], axis=1)                      # (D, 2D)
    bqk = s * jax.random.normal(ks[2], (1, 2 * d_model), f32)
    wv = s * jax.random.normal(ks[3], (d_model, d_model), f32)
    bv = s * jax.random.normal(ks[4], (1, d_model), f32)
    wo = s * jax.random.normal(ks[5], (d_model, d_model), f32)
    bo = s * jax.random.normal(ks[6], (1, d_model), f32)
    g1 = 1.0 + s * jax.random.normal(ks[7], (1, d_model), f32)
    be1 = s * jax.random.normal(ks[8], (1, d_model), f32)
    w1 = s * jax.random.normal(ks[9], (d_model, dim_feedforward), f32)
    b1 = s * jax.random.normal(ks[10], (1, dim_feedforward), f32)
    w2 = s * jax.random.normal(ks[11], (dim_feedforward, d_model), f32)
    b2 = s * jax.random.normal(ks[12], (1, d_model), f32)
    g2 = 1.0 + s * jax.random.normal(ks[13], (1, d_model), f32)
    be2 = s * jax.random.normal(ks[14], (1, d_model), f32)
    return (wqk, bqk, wv, bv, wo, bo, g1, be1, w1, b1, w2, b2, g2, be2)


def reference(x, pos, params, *, nhead, eps=1e-5):
    """Pure-JAX reference matching PyTorch TransformerEncoderLayer (eval, post-norm)."""
    wqk, bqk, wv, bv, wo, bo, g1, be1, w1, b1, w2, b2, g2, be2 = params
    B, S, D = x.shape
    hd = D // nhead

    xp = x + pos[None]
    qk = xp @ wqk + bqk
    q, k = qk[..., :D], qk[..., D:]
    v = x @ wv + bv

    def split(t):
        return t.reshape(B, S, nhead, hd).transpose(0, 2, 1, 3)

    qh, kh, vh = split(q), split(k), split(v)
    s = jnp.einsum('bhqd,bhkd->bhqk', qh, kh) / math.sqrt(hd)
    p = jax.nn.softmax(s, axis=-1)
    a = jnp.einsum('bhqk,bhkd->bhqd', p, vh).transpose(0, 2, 1, 3).reshape(B, S, D)
    a = a @ wo + bo

    def ln(t, g, be):
        mu = jnp.mean(t, axis=-1, keepdims=True)
        var = jnp.mean((t - mu) ** 2, axis=-1, keepdims=True)
        return (t - mu) / jnp.sqrt(var + eps) * g + be

    y = ln(x + a, g1, be1)
    h = jnp.maximum(y @ w1 + b1, 0.0)
    f = h @ w2 + b2
    return ln(y + f, g2, be2)


if __name__ == "__main__":
    B, S, D, NHEAD, FF = 2, 16, 32, 4, 64
    key = jax.random.PRNGKey(0)
    kx, kpos, kp = jax.random.split(key, 3)

    x = jax.random.normal(kx, (B, S, D), jnp.float32)
    pos = 0.1 * jax.random.normal(kpos, (S, D), jnp.float32)
    params = make_params(kp, D, FF)

    out = transformer_encoder_layer(x, pos, params, nhead=NHEAD)
    out = jax.block_until_ready(out)

    ref = reference(x, pos, params, nhead=NHEAD)
    assert out.shape == (B, S, D)
    assert jnp.allclose(out, ref, atol=1e-4, rtol=1e-4), "mismatch vs JAX reference"

    print("KERNEL_OK")
</pallas_src>

<mosaic_0001>
module attributes {stable_mosaic.version = 11 : i64} {
  func.func @encoder_layer_kernel(%arg0: i32, %arg1: memref<1x16x32xf32, #tpu.memory_space<vmem>>, %arg2: memref<16x32xf32, #tpu.memory_space<vmem>>, %arg3: memref<32x64xf32, #tpu.memory_space<vmem>>, %arg4: memref<1x64xf32, #tpu.memory_space<vmem>>, %arg5: memref<32x32xf32, #tpu.memory_space<vmem>>, %arg6: memref<1x32xf32, #tpu.memory_space<vmem>>, %arg7: memref<32x32xf32, #tpu.memory_space<vmem>>, %arg8: memref<1x32xf32, #tpu.memory_space<vmem>>, %arg9: memref<1x32xf32, #tpu.memory_space<vmem>>, %arg10: memref<1x32xf32, #tpu.memory_space<vmem>>, %arg11: memref<32x64xf32, #tpu.memory_space<vmem>>, %arg12: memref<1x64xf32, #tpu.memory_space<vmem>>, %arg13: memref<64x32xf32, #tpu.memory_space<vmem>>, %arg14: memref<1x32xf32, #tpu.memory_space<vmem>>, %arg15: memref<1x32xf32, #tpu.memory_space<vmem>>, %arg16: memref<1x32xf32, #tpu.memory_space<vmem>>, %arg17: memref<1x16x32xf32, #tpu.memory_space<vmem>>) attributes {dimension_semantics = [#tpu.dimension_semantics<parallel>], iteration_bounds = array<i64: 2>, scalar_prefetch = 0 : i64, scratch_operands = 0 : i64, tpu.core_type = #tpu.core_type<tc>, window_params = [{transform_indices = @transform_0, window_bounds = array<i64: 1, 16, 32>}, {pipeline_mode = #tpu.pipeline_mode<synchronous>, transform_indices = @transform_1, window_bounds = array<i64: 16, 32>}, {pipeline_mode = #tpu.pipeline_mode<synchronous>, transform_indices = @transform_2, window_bounds = array<i64: 32, 64>}, {pipeline_mode = #tpu.pipeline_mode<synchronous>, transform_indices = @transform_3, window_bounds = array<i64: 1, 64>}, {pipeline_mode = #tpu.pipeline_mode<synchronous>, transform_indices = @transform_4, window_bounds = array<i64: 32, 32>}, {pipeline_mode = #tpu.pipeline_mode<synchronous>, transform_indices = @transform_5, window_bounds = array<i64: 1, 32>}, {pipeline_mode = #tpu.pipeline_mode<synchronous>, transform_indices = @transform_6, window_bounds = array<i64: 32, 32>}, {pipeline_mode = #tpu.pipeline_mode<synchronous>, transform_indices = @transform_7, window_bounds = array<i64: 1, 32>}, {pipeline_mode = #tpu.pipeline_mode<synchronous>, transform_indices = @transform_8, window_bounds = array<i64: 1, 32>}, {pipeline_mode = #tpu.pipeline_mode<synchronous>, transform_indices = @transform_9, window_bounds = array<i64: 1, 32>}, {pipeline_mode = #tpu.pipeline_mode<synchronous>, transform_indices = @transform_10, window_bounds = array<i64: 32, 64>}, {pipeline_mode = #tpu.pipeline_mode<synchronous>, transform_indices = @transform_11, window_bounds = array<i64: 1, 64>}, {pipeline_mode = #tpu.pipeline_mode<synchronous>, transform_indices = @transform_12, window_bounds = array<i64: 64, 32>}, {pipeline_mode = #tpu.pipeline_mode<synchronous>, transform_indices = @transform_13, window_bounds = array<i64: 1, 32>}, {pipeline_mode = #tpu.pipeline_mode<synchronous>, transform_indices = @transform_14, window_bounds = array<i64: 1, 32>}, {pipeline_mode = #tpu.pipeline_mode<synchronous>, transform_indices = @transform_15, window_bounds = array<i64: 1, 32>}, {transform_indices = @transform_16, window_bounds = array<i64: 1, 16, 32>}]} {
    %c0 = arith.constant 0 : index
    %c0_0 = arith.constant 0 : index
    %c0_1 = arith.constant 0 : index
    %0 = vector.load %arg1[%c0, %c0_0, %c0_1] : memref<1x16x32xf32, #tpu.memory_space<vmem>>, vector<1x16x32xf32>
    %1 = vector.shape_cast %0 : vector<1x16x32xf32> to vector<16x32xf32>
    %c0_2 = arith.constant 0 : index
    %c0_3 = arith.constant 0 : index
    %2 = vector.load %arg2[%c0_2, %c0_3] : memref<16x32xf32, #tpu.memory_space<vmem>>, vector<16x32xf32>
    %3 = arith.addf %1, %2 : vector<16x32xf32>
    %c0_4 = arith.constant 0 : index
    %c0_5 = arith.constant 0 : index
    %4 = vector.load %arg3[%c0_4, %c0_5] : memref<32x64xf32, #tpu.memory_space<vmem>>, vector<32x64xf32>
    %cst = arith.constant dense<0.000000e+00> : vector<16x64xf32>
    %5 = tpu.matmul %3, %4, %cst {dimension_numbers = #tpu.dot_dimension_numbers<[1], [0], [0], [1], [0, 0, 1, 1], [], []>} : vector<16x32xf32>, vector<32x64xf32>, vector<16x64xf32> -> vector<16x64xf32>
    %c0_6 = arith.constant 0 : index
    %c0_7 = arith.constant 0 : index
    %6 = vector.load %arg4[%c0_6, %c0_7] : memref<1x64xf32, #tpu.memory_space<vmem>>, vector<1x64xf32>
    %7 = vector.broadcast %6 : vector<1x64xf32> to vector<16x64xf32>
    %8 = arith.addf %5, %7 : vector<16x64xf32>
    %9 = vector.extract_strided_slice %8 {offsets = [0, 0], sizes = [16, 32], strides = [1, 1]} : vector<16x64xf32> to vector<16x32xf32>
    %10 = vector.extract_strided_slice %8 {offsets = [0, 32], sizes = [16, 32], strides = [1, 1]} : vector<16x64xf32> to vector<16x32xf32>
    %c0_8 = arith.constant 0 : index
    %c0_9 = arith.constant 0 : index
    %11 = vector.load %arg5[%c0_8, %c0_9] : memref<32x32xf32, #tpu.memory_space<vmem>>, vector<32x32xf32>
    %cst_10 = arith.constant dense<0.000000e+00> : vector<16x32xf32>
    %12 = tpu.matmul %1, %11, %cst_10 {dimension_numbers = #tpu.dot_dimension_numbers<[1], [0], [0], [1], [0, 0, 1, 1], [], []>} : vector<16x32xf32>, vector<32x32xf32>, vector<16x32xf32> -> vector<16x32xf32>
    %c0_11 = arith.constant 0 : index
    %c0_12 = arith.constant 0 : index
    %13 = vector.load %arg6[%c0_11, %c0_12] : memref<1x32xf32, #tpu.memory_space<vmem>>, vector<1x32xf32>
    %14 = vector.broadcast %13 : vector<1x32xf32> to vector<16x32xf32>
    %15 = arith.addf %12, %14 : vector<16x32xf32>
    %16 = vector.extract_strided_slice %9 {offsets = [0, 0], sizes = [16, 8], strides = [1, 1]} : vector<16x32xf32> to vector<16x8xf32>
    %17 = vector.extract_strided_slice %10 {offsets = [0, 0], sizes = [16, 8], strides = [1, 1]} : vector<16x32xf32> to vector<16x8xf32>
    %18 = vector.extract_strided_slice %15 {offsets = [0, 0], sizes = [16, 8], strides = [1, 1]} : vector<16x32xf32> to vector<16x8xf32>
    %cst_13 = arith.constant dense<0.000000e+00> : vector<16x16xf32>
    %19 = tpu.matmul %16, %17, %cst_13 {dimension_numbers = #tpu.dot_dimension_numbers<[1], [1], [0], [0], [0, 0, 1, 0], [], []>} : vector<16x8xf32>, vector<16x8xf32>, vector<16x16xf32> -> vector<16x16xf32>
    %cst_14 = arith.constant 0.353553385 : f32
    %20 = vector.broadcast %cst_14 : f32 to vector<16x16xf32>
    %21 = arith.mulf %19, %20 : vector<16x16xf32>
    %cst_15 = arith.constant dense<0xFF800000> : vector<16xf32>
    %22 = vector.multi_reduction <maximumf>, %21, %cst_15 [1] : vector<16x16xf32> to vector<16xf32>
    %23 = vector.shape_cast %22 : vector<16xf32> to vector<16x1xf32>
    %24 = vector.broadcast %23 : vector<16x1xf32> to vector<16x16xf32>
    %25 = arith.subf %21, %24 : vector<16x16xf32>
    %26 = math.exp %25 : vector<16x16xf32>
    %cst_16 = arith.constant dense<0.000000e+00> : vector<16xf32>
    %27 = vector.multi_reduction <add>, %26, %cst_16 [1] : vector<16x16xf32> to vector<16xf32>
    %28 = vector.shape_cast %27 : vector<16xf32> to vector<16x1xf32>
    %29 = vector.broadcast %28 : vector<16x1xf32> to vector<16x16xf32>
    %30 = arith.divf %26, %29 : vector<16x16xf32>
    %cst_17 = arith.constant dense<0.000000e+00> : vector<16x8xf32>
    %31 = tpu.matmul %30, %18, %cst_17 {dimension_numbers = #tpu.dot_dimension_numbers<[1], [0], [0], [1], [0, 0, 1, 1], [], []>} : vector<16x16xf32>, vector<16x8xf32>, vector<16x8xf32> -> vector<16x8xf32>
    %32 = vector.extract_strided_slice %9 {offsets = [0, 8], sizes = [16, 8], strides = [1, 1]} : vector<16x32xf32> to vector<16x8xf32>
    %33 = vector.extract_strided_slice %10 {offsets = [0, 8], sizes = [16, 8], strides = [1, 1]} : vector<16x32xf32> to vector<16x8xf32>
    %34 = vector.extract_strided_slice %15 {offsets = [0, 8], sizes = [16, 8], strides = [1, 1]} : vector<16x32xf32> to vector<16x8xf32>
    %cst_18 = arith.constant dense<0.000000e+00> : vector<16x16xf32>
    %35 = tpu.matmul %32, %33, %cst_18 {dimension_numbers = #tpu.dot_dimension_numbers<[1], [1], [0], [0], [0, 0, 1, 0], [], []>} : vector<16x8xf32>, vector<16x8xf32>, vector<16x16xf32> -> vector<16x16xf32>
    %cst_19 = arith.constant 0.353553385 : f32
    %36 = vector.broadcast %cst_19 : f32 to vector<16x16xf32>
    %37 = arith.mulf %35, %36 : vector<16x16xf32>
    %cst_20 = arith.constant dense<0xFF800000> : vector<16xf32>
    %38 = vector.multi_reduction <maximumf>, %37, %cst_20 [1] : vector<16x16xf32> to vector<16xf32>
    %39 = vector.shape_cast %38 : vector<16xf32> to vector<16x1xf32>
    %40 = vector.broadcast %39 : vector<16x1xf32> to vector<16x16xf32>
    %41 = arith.subf %37, %40 : vector<16x16xf32>
    %42 = math.exp %41 : vector<16x16xf32>
    %cst_21 = arith.constant dense<0.000000e+00> : vector<16xf32>
    %43 = vector.multi_reduction <add>, %42, %cst_21 [1] : vector<16x16xf32> to vector<16xf32>
    %44 = vector.shape_cast %43 : vector<16xf32> to vector<16x1xf32>
    %45 = vector.broadcast %44 : vector<16x1xf32> to vector<16x16xf32>
    %46 = arith.divf %42, %45 : vector<16x16xf32>
    %cst_22 = arith.constant dense<0.000000e+00> : vector<16x8xf32>
    %47 = tpu.matmul %46, %34, %cst_22 {dimension_numbers = #tpu.dot_dimension_numbers<[1], [0], [0], [1], [0, 0, 1, 1], [], []>} : vector<16x16xf32>, vector<16x8xf32>, vector<16x8xf32> -> vector<16x8xf32>
    %48 = vector.extract_strided_slice %9 {offsets = [0, 16], sizes = [16, 8], strides = [1, 1]} : vector<16x32xf32> to vector<16x8xf32>
    %49 = vector.extract_strided_slice %10 {offsets = [0, 16], sizes = [16, 8], strides = [1, 1]} : vector<16x32xf32> to vector<16x8xf32>
    %50 = vector.extract_strided_slice %15 {offsets = [0, 16], sizes = [16, 8], strides = [1, 1]} : vector<16x32xf32> to vector<16x8xf32>
    %cst_23 = arith.constant dense<0.000000e+00> : vector<16x16xf32>
    %51 = tpu.matmul %48, %49, %cst_23 {dimension_numbers = #tpu.dot_dimension_numbers<[1], [1], [0], [0], [0, 0, 1, 0], [], []>} : vector<16x8xf32>, vector<16x8xf32>, vector<16x16xf32> -> vector<16x16xf32>
    %cst_24 = arith.constant 0.353553385 : f32
    %52 = vector.broadcast %cst_24 : f32 to vector<16x16xf32>
    %53 = arith.mulf %51, %52 : vector<16x16xf32>
    %cst_25 = arith.constant dense<0xFF800000> : vector<16xf32>
    %54 = vector.multi_reduction <maximumf>, %53, %cst_25 [1] : vector<16x16xf32> to vector<16xf32>
    %55 = vector.shape_cast %54 : vector<16xf32> to vector<16x1xf32>
    %56 = vector.broadcast %55 : vector<16x1xf32> to vector<16x16xf32>
    %57 = arith.subf %53, %56 : vector<16x16xf32>
    %58 = math.exp %57 : vector<16x16xf32>
    %cst_26 = arith.constant dense<0.000000e+00> : vector<16xf32>
    %59 = vector.multi_reduction <add>, %58, %cst_26 [1] : vector<16x16xf32> to vector<16xf32>
    %60 = vector.shape_cast %59 : vector<16xf32> to vector<16x1xf32>
    %61 = vector.broadcast %60 : vector<16x1xf32> to vector<16x16xf32>
    %62 = arith.divf %58, %61 : vector<16x16xf32>
    %cst_27 = arith.constant dense<0.000000e+00> : vector<16x8xf32>
    %63 = tpu.matmul %62, %50, %cst_27 {dimension_numbers = #tpu.dot_dimension_numbers<[1], [0], [0], [1], [0, 0, 1, 1], [], []>} : vector<16x16xf32>, vector<16x8xf32>, vector<16x8xf32> -> vector<16x8xf32>
    %64 = vector.extract_strided_slice %9 {offsets = [0, 24], sizes = [16, 8], strides = [1, 1]} : vector<16x32xf32> to vector<16x8xf32>
    %65 = vector.extract_strided_slice %10 {offsets = [0, 24], sizes = [16, 8], strides = [1, 1]} : vector<16x32xf32> to vector<16x8xf32>
    %66 = vector.extract_strided_slice %15 {offsets = [0, 24], sizes = [16, 8], strides = [1, 1]} : vector<16x32xf32> to vector<16x8xf32>
    %cst_28 = arith.constant dense<0.000000e+00> : vector<16x16xf32>
    %67 = tpu.matmul %64, %65, %cst_28 {dimension_numbers = #tpu.dot_dimension_numbers<[1], [1], [0], [0], [0, 0, 1, 0], [], []>} : vector<16x8xf32>, vector<16x8xf32>, vector<16x16xf32> -> vector<16x16xf32>
    %cst_29 = arith.constant 0.353553385 : f32
    %68 = vector.broadcast %cst_29 : f32 to vector<16x16xf32>
    %69 = arith.mulf %67, %68 : vector<16x16xf32>
    %cst_30 = arith.constant dense<0xFF800000> : vector<16xf32>
    %70 = vector.multi_reduction <maximumf>, %69, %cst_30 [1] : vector<16x16xf32> to vector<16xf32>
    %71 = vector.shape_cast %70 : vector<16xf32> to vector<16x1xf32>
    %72 = vector.broadcast %71 : vector<16x1xf32> to vector<16x16xf32>
    %73 = arith.subf %69, %72 : vector<16x16xf32>
    %74 = math.exp %73 : vector<16x16xf32>
    %cst_31 = arith.constant dense<0.000000e+00> : vector<16xf32>
    %75 = vector.multi_reduction <add>, %74, %cst_31 [1] : vector<16x16xf32> to vector<16xf32>
    %76 = vector.shape_cast %75 : vector<16xf32> to vector<16x1xf32>
    %77 = vector.broadcast %76 : vector<16x1xf32> to vector<16x16xf32>
    %78 = arith.divf %74, %77 : vector<16x16xf32>
    %cst_32 = arith.constant dense<0.000000e+00> : vector<16x8xf32>
    %79 = tpu.matmul %78, %66, %cst_32 {dimension_numbers = #tpu.dot_dimension_numbers<[1], [0], [0], [1], [0, 0, 1, 1], [], []>} : vector<16x16xf32>, vector<16x8xf32>, vector<16x8xf32> -> vector<16x8xf32>
    %80 = tpu.concatenate %31, %47, %63, %79 in 1 : vector<16x8xf32>, vector<16x8xf32>, vector<16x8xf32>, vector<16x8xf32> -> vector<16x32xf32>
    %c0_33 = arith.constant 0 : index
    %c0_34 = arith.constant 0 : index
    %81 = vector.load %arg7[%c0_33, %c0_34] : memref<32x32xf32, #tpu.memory_space<vmem>>, vector<32x32xf32>
    %cst_35 = arith.constant dense<0.000000e+00> : vector<16x32xf32>
    %82 = tpu.matmul %80, %81, %cst_35 {dimension_numbers = #tpu.dot_dimension_numbers<[1], [0], [0], [1], [0, 0, 1, 1], [], []>} : vector<16x32xf32>, vector<32x32xf32>, vector<16x32xf32> -> vector<16x32xf32>
    %c0_36 = arith.constant 0 : index
    %c0_37 = arith.constant 0 : index
    %83 = vector.load %arg8[%c0_36, %c0_37] : memref<1x32xf32, #tpu.memory_space<vmem>>, vector<1x32xf32>
    %84 = vector.broadcast %83 : vector<1x32xf32> to vector<16x32xf32>
    %85 = arith.addf %82, %84 : vector<16x32xf32>
    %86 = arith.addf %1, %85 : vector<16x32xf32>
    %c0_38 = arith.constant 0 : index
    %c0_39 = arith.constant 0 : index
    %87 = vector.load %arg9[%c0_38, %c0_39] : memref<1x32xf32, #tpu.memory_space<vmem>>, vector<1x32xf32>
    %c0_40 = arith.constant 0 : index
    %c0_41 = arith.constant 0 : index
    %88 = vector.load %arg10[%c0_40, %c0_41] : memref<1x32xf32, #tpu.memory_space<vmem>>, vector<1x32xf32>
    %cst_42 = arith.constant dense<0.000000e+00> : vector<16xf32>
    %89 = vector.multi_reduction <add>, %86, %cst_42 [1] : vector<16x32xf32> to vector<16xf32>
    %90 = vector.shape_cast %89 : vector<16xf32> to vector<16x1xf32>
    %cst_43 = arith.constant 3.200000e+01 : f32
    %91 = vector.broadcast %cst_43 : f32 to vector<16x1xf32>
    %92 = arith.divf %90, %91 : vector<16x1xf32>
    %93 = vector.broadcast %92 : vector<16x1xf32> to vector<16x32xf32>
    %94 = arith.subf %86, %93 : vector<16x32xf32>
    %95 = vector.broadcast %92 : vector<16x1xf32> to vector<16x32xf32>
    %96 = arith.subf %86, %95 : vector<16x32xf32>
    %97 = arith.mulf %94, %96 : vector<16x32xf32>
    %cst_44 = arith.constant dense<0.000000e+00> : vector<16xf32>
    %98 = vector.multi_reduction <add>, %97, %cst_44 [1] : vector<16x32xf32> to vector<16xf32>
    %99 = vector.shape_cast %98 : vector<16xf32> to vector<16x1xf32>
    %cst_45 = arith.constant 3.200000e+01 : f32
    %100 = vector.broadcast %cst_45 : f32 to vector<16x1xf32>
    %101 = arith.divf %99, %100 : vector<16x1xf32>
    %102 = vector.broadcast %92 : vector<16x1xf32> to vector<16x32xf32>
    %103 = arith.subf %86, %102 : vector<16x32xf32>
    %cst_46 = arith.constant 9.99999974E-6 : f32
    %104 = vector.broadcast %cst_46 : f32 to vector<16x1xf32>
    %105 = arith.addf %101, %104 : vector<16x1xf32>
    %106 = math.rsqrt %105 : vector<16x1xf32>
    %107 = vector.broadcast %106 : vector<16x1xf32> to vector<16x32xf32>
    %108 = arith.mulf %103, %107 : vector<16x32xf32>
    %109 = vector.broadcast %87 : vector<1x32xf32> to vector<16x32xf32>
    %110 = arith.mulf %108, %109 : vector<16x32xf32>
    %111 = vector.broadcast %88 : vector<1x32xf32> to vector<16x32xf32>
    %112 = arith.addf %110, %111 : vector<16x32xf32>
    %c0_47 = arith.constant 0 : index
    %c0_48 = arith.constant 0 : index
    %113 = vector.load %arg11[%c0_47, %c0_48] : memref<32x64xf32, #tpu.memory_space<vmem>>, vector<32x64xf32>
    %cst_49 = arith.constant dense<0.000000e+00> : vector<16x64xf32>
    %114 = tpu.matmul %112, %113, %cst_49 {dimension_numbers = #tpu.dot_dimension_numbers<[1], [0], [0], [1], [0, 0, 1, 1], [], []>} : vector<16x32xf32>, vector<32x64xf32>, vector<16x64xf32> -> vector<16x64xf32>
    %c0_50 = arith.constant 0 : index
    %c0_51 = arith.constant 0 : index
    %115 = vector.load %arg12[%c0_50, %c0_51] : memref<1x64xf32, #tpu.memory_space<vmem>>, vector<1x64xf32>
    %116 = vector.broadcast %115 : vector<1x64xf32> to vector<16x64xf32>
    %117 = arith.addf %114, %116 : vector<16x64xf32>
    %cst_52 = arith.constant 0.000000e+00 : f32
    %118 = vector.broadcast %cst_52 : f32 to vector<16x64xf32>
    %119 = arith.maximumf %117, %118 : vector<16x64xf32>
    %c0_53 = arith.constant 0 : index
    %c0_54 = arith.constant 0 : index
    %120 = vector.load %arg13[%c0_53, %c0_54] : memref<64x32xf32, #tpu.memory_space<vmem>>, vector<64x32xf32>
    %cst_55 = arith.constant dense<0.000000e+00> : vector<16x32xf32>
    %121 = tpu.matmul %119, %120, %cst_55 {dimension_numbers = #tpu.dot_dimension_numbers<[1], [0], [0], [1], [0, 0, 1, 1], [], []>} : vector<16x64xf32>, vector<64x32xf32>, vector<16x32xf32> -> vector<16x32xf32>
    %c0_56 = arith.constant 0 : index
    %c0_57 = arith.constant 0 : index
    %122 = vector.load %arg14[%c0_56, %c0_57] : memref<1x32xf32, #tpu.memory_space<vmem>>, vector<1x32xf32>
    %123 = vector.broadcast %122 : vector<1x32xf32> to vector<16x32xf32>
    %124 = arith.addf %121, %123 : vector<16x32xf32>
    %125 = arith.addf %112, %124 : vector<16x32xf32>
    %c0_58 = arith.constant 0 : index
    %c0_59 = arith.constant 0 : index
    %126 = vector.load %arg15[%c0_58, %c0_59] : memref<1x32xf32, #tpu.memory_space<vmem>>, vector<1x32xf32>
    %c0_60 = arith.constant 0 : index
    %c0_61 = arith.constant 0 : index
    %127 = vector.load %arg16[%c0_60, %c0_61] : memref<1x32xf32, #tpu.memory_space<vmem>>, vector<1x32xf32>
    %cst_62 = arith.constant dense<0.000000e+00> : vector<16xf32>
    %128 = vector.multi_reduction <add>, %125, %cst_62 [1] : vector<16x32xf32> to vector<16xf32>
    %129 = vector.shape_cast %128 : vector<16xf32> to vector<16x1xf32>
    %cst_63 = arith.constant 3.200000e+01 : f32
    %130 = vector.broadcast %cst_63 : f32 to vector<16x1xf32>
    %131 = arith.divf %129, %130 : vector<16x1xf32>
    %132 = vector.broadcast %131 : vector<16x1xf32> to vector<16x32xf32>
    %133 = arith.subf %125, %132 : vector<16x32xf32>
    %134 = vector.broadcast %131 : vector<16x1xf32> to vector<16x32xf32>
    %135 = arith.subf %125, %134 : vector<16x32xf32>
    %136 = arith.mulf %133, %135 : vector<16x32xf32>
    %cst_64 = arith.constant dense<0.000000e+00> : vector<16xf32>
    %137 = vector.multi_reduction <add>, %136, %cst_64 [1] : vector<16x32xf32> to vector<16xf32>
    %138 = vector.shape_cast %137 : vector<16xf32> to vector<16x1xf32>
    %cst_65 = arith.constant 3.200000e+01 : f32
    %139 = vector.broadcast %cst_65 : f32 to vector<16x1xf32>
    %140 = arith.divf %138, %139 : vector<16x1xf32>
    %141 = vector.broadcast %131 : vector<16x1xf32> to vector<16x32xf32>
    %142 = arith.subf %125, %141 : vector<16x32xf32>
    %cst_66 = arith.constant 9.99999974E-6 : f32
    %143 = vector.broadcast %cst_66 : f32 to vector<16x1xf32>
    %144 = arith.addf %140, %143 : vector<16x1xf32>
    %145 = math.rsqrt %144 : vector<16x1xf32>
    %146 = vector.broadcast %145 : vector<16x1xf32> to vector<16x32xf32>
    %147 = arith.mulf %142, %146 : vector<16x32xf32>
    %148 = vector.broadcast %126 : vector<1x32xf32> to vector<16x32xf32>
    %149 = arith.mulf %147, %148 : vector<16x32xf32>
    %150 = vector.broadcast %127 : vector<1x32xf32> to vector<16x32xf32>
    %151 = arith.addf %149, %150 : vector<16x32xf32>
    %152 = vector.shape_cast %151 : vector<16x32xf32> to vector<1x16x32xf32>
    %c0_67 = arith.constant 0 : index
    %c0_68 = arith.constant 0 : index
    %c0_69 = arith.constant 0 : index
    %153 = vector.load %arg17[%c0_67, %c0_68, %c0_69] : memref<1x16x32xf32, #tpu.memory_space<vmem>>, vector<1x16x32xf32>
    tpu.vector_store %arg17[%c0_67, %c0_68, %c0_69], %152 {strides = array<i32>} : memref<1x16x32xf32, #tpu.memory_space<vmem>>, vector<1x16x32xf32>,
    return
  }
  func.func @transform_0(%arg0: i32) -> (i32, i32, i32) {
    %c0_i32 = arith.constant 0 : i32
    %c0_i32_0 = arith.constant 0 : i32
    %c0_i32_1 = arith.constant 0 : i32
    return %arg0, %c0_i32, %c0_i32_0 : i32, i32, i32
  }
  func.func @transform_1(%arg0: i32) -> (i32, i32) {
    %c0_i32 = arith.constant 0 : i32
    %c0_i32_0 = arith.constant 0 : i32
    %c0_i32_1 = arith.constant 0 : i32
    return %c0_i32, %c0_i32_0 : i32, i32
  }
  func.func @transform_2(%arg0: i32) -> (i32, i32) {
    %c0_i32 = arith.constant 0 : i32
    %c0_i32_0 = arith.constant 0 : i32
    %c0_i32_1 = arith.constant 0 : i32
    return %c0_i32, %c0_i32_0 : i32, i32
  }
  func.func @transform_3(%arg0: i32) -> (i32, i32) {
    %c0_i32 = arith.constant 0 : i32
    %c0_i32_0 = arith.constant 0 : i32
    %c0_i32_1 = arith.constant 0 : i32
    return %c0_i32, %c0_i32_0 : i32, i32
  }
  func.func @transform_4(%arg0: i32) -> (i32, i32) {
    %c0_i32 = arith.constant 0 : i32
    %c0_i32_0 = arith.constant 0 : i32
    %c0_i32_1 = arith.constant 0 : i32
    return %c0_i32, %c0_i32_0 : i32, i32
  }
  func.func @transform_5(%arg0: i32) -> (i32, i32) {
    %c0_i32 = arith.constant 0 : i32
    %c0_i32_0 = arith.constant 0 : i32
    %c0_i32_1 = arith.constant 0 : i32
    return %c0_i32, %c0_i32_0 : i32, i32
  }
  func.func @transform_6(%arg0: i32) -> (i32, i32) {
    %c0_i32 = arith.constant 0 : i32
    %c0_i32_0 = arith.constant 0 : i32
    %c0_i32_1 = arith.constant 0 : i32
    return %c0_i32, %c0_i32_0 : i32, i32
  }
  func.func @transform_7(%arg0: i32) -> (i32, i32) {
    %c0_i32 = arith.constant 0 : i32
    %c0_i32_0 = arith.constant 0 : i32
    %c0_i32_1 = arith.constant 0 : i32
    return %c0_i32, %c0_i32_0 : i32, i32
  }
  func.func @transform_8(%arg0: i32) -> (i32, i32) {
    %c0_i32 = arith.constant 0 : i32
    %c0_i32_0 = arith.constant 0 : i32
    %c0_i32_1 = arith.constant 0 : i32
    return %c0_i32, %c0_i32_0 : i32, i32
  }
  func.func @transform_9(%arg0: i32) -> (i32, i32) {
    %c0_i32 = arith.constant 0 : i32
    %c0_i32_0 = arith.constant 0 : i32
    %c0_i32_1 = arith.constant 0 : i32
    return %c0_i32, %c0_i32_0 : i32, i32
  }
  func.func @transform_10(%arg0: i32) -> (i32, i32) {
    %c0_i32 = arith.constant 0 : i32
    %c0_i32_0 = arith.constant 0 : i32
    %c0_i32_1 = arith.constant 0 : i32
    return %c0_i32, %c0_i32_0 : i32, i32
  }
  func.func @transform_11(%arg0: i32) -> (i32, i32) {
    %c0_i32 = arith.constant 0 : i32
    %c0_i32_0 = arith.constant 0 : i32
    %c0_i32_1 = arith.constant 0 : i32
    return %c0_i32, %c0_i32_0 : i32, i32
  }
  func.func @transform_12(%arg0: i32) -> (i32, i32) {
    %c0_i32 = arith.constant 0 : i32
    %c0_i32_0 = arith.constant 0 : i32
    %c0_i32_1 = arith.constant 0 : i32
    return %c0_i32, %c0_i32_0 : i32, i32
  }
  func.func @transform_13(%arg0: i32) -> (i32, i32) {
    %c0_i32 = arith.constant 0 : i32
    %c0_i32_0 = arith.constant 0 : i32
    %c0_i32_1 = arith.constant 0 : i32
    return %c0_i32, %c0_i32_0 : i32, i32
  }
  func.func @transform_14(%arg0: i32) -> (i32, i32) {
    %c0_i32 = arith.constant 0 : i32
    %c0_i32_0 = arith.constant 0 : i32
    %c0_i32_1 = arith.constant 0 : i32
    return %c0_i32, %c0_i32_0 : i32, i32
  }
  func.func @transform_15(%arg0: i32) -> (i32, i32) {
    %c0_i32 = arith.constant 0 : i32
    %c0_i32_0 = arith.constant 0 : i32
    %c0_i32_1 = arith.constant 0 : i32
    return %c0_i32, %c0_i32_0 : i32, i32
  }
  func.func @transform_16(%arg0: i32) -> (i32, i32, i32) {
    %c0_i32 = arith.constant 0 : i32
    %c0_i32_0 = arith.constant 0 : i32
    %c0_i32_1 = arith.constant 0 : i32
    return %arg0, %c0_i32, %c0_i32_0 : i32, i32, i32
  }
}

</mosaic_0001>

<llo_original>
// kernel: tpu_custom_call.1
$region0: #{tpu_custom_call.1}
  #allocation0 [shape = 'u32[]', space=smem, size = 0x4, offset = 0x4, fixed_abs, tag = 'smem constant byte address 0x4 - core index']
  #allocation1 [shape = 'u32[144,128]{1,0:T(1,128)}', space=vmem, size = 0x12000, scoped, tag = 'internal scratch']
  %s0 = inlined_call_operand.vmem [shape: f32[2,16,32], index: 0, kind: input, shape index: {}]
  %s1 = inlined_call_operand.hbm [shape: f32[16,32], index: 1, kind: input, shape index: {}]
  %s2 = inlined_call_operand.vmem [shape: f32[32,64], index: 2, kind: input, shape index: {}]
  %s3 = inlined_call_operand.vmem [shape: f32[1,64], index: 3, kind: input, shape index: {}]
  %s4 = inlined_call_operand.vmem [shape: f32[32,32], index: 4, kind: input, shape index: {}]
  %s5 = inlined_call_operand.vmem [shape: f32[1,32], index: 5, kind: input, shape index: {}]
  %s6 = inlined_call_operand.hbm [shape: f32[32,32], index: 6, kind: input, shape index: {}]
  %s7 = inlined_call_operand.vmem [shape: f32[1,32], index: 7, kind: input, shape index: {}]
  %s8 = inlined_call_operand.vmem [shape: f32[1,32], index: 8, kind: input, shape index: {}]
  %s9 = inlined_call_operand.vmem [shape: f32[1,32], index: 9, kind: input, shape index: {}]
  %s10 = inlined_call_operand.hbm [shape: f32[32,64], index: 10, kind: input, shape index: {}]
  %s11 = inlined_call_operand.vmem [shape: f32[1,64], index: 11, kind: input, shape index: {}]
  %s12 = inlined_call_operand.vmem [shape: f32[64,32], index: 12, kind: input, shape index: {}]
  %s13 = inlined_call_operand.vmem [shape: f32[1,32], index: 13, kind: input, shape index: {}]
  %s14 = inlined_call_operand.vmem [shape: f32[1,32], index: 14, kind: input, shape index: {}]
  %s15 = inlined_call_operand.vmem [shape: f32[1,32], index: 15, kind: input, shape index: {}]
  %s16 = inlined_call_operand.hbm [shape: f32[2,16,32], index: 16, kind: output, shape index: {}]
  %s17 = sld [smem:[#allocation0]]
  $region109: #{tpu_custom_call.1} parent=0
    _
  %s19 = ssub.s32 1, %s17
  %s20 = scalar_select 0, %s19, %s17
  $region1: #{tpu_custom_call.1} parent=0
    #allocation2 [shape = 'u8[8192]{0}', space=vmem, size = 0x2000, scoped, tag = 'input window, operand 1, single buffered']
    #allocation3 [shape = 's32[2]{0}', space=sflag, size = 0x8, scoped, tag = 'scoped memory for tpu_custom_call.1']
    #allocation4 [shape = 's32[2]{0}', space=sflag, size = 0x8, scoped, tag = 'scoped memory for tpu_custom_call.1']
    #allocation5 [shape = 'u8[16384]{0}', space=vmem, size = 0x4000, scoped, tag = 'input window, operand 6, single buffered']
    #allocation6 [shape = 's32[1]{0}', space=sflag, size = 0x4, scoped, tag = 'scoped memory for tpu_custom_call.1']
    #allocation7 [shape = 'u8[16384]{0}', space=vmem, size = 0x4000, scoped, tag = 'input window, operand 10, single buffered']
    #allocation8 [shape = 'u8[16384]{0}', space=vmem, size = 0x4000, scoped, tag = 'output window, operand 0']
    %21 = vsyncpa [#allocation3], 0
    %22 = vsyncpa [#allocation6], 0
    %23 = vsyncpa [#allocation4], 0
    %s24 = scalar_lea.sflag [#allocation4], 1
    %25 = vsyncpa %s24, 0
    loop: start=0, step=1, limit=4
    $region2: #{tpu_custom_call.1} parent=1 // loop_pre_header
      _
    $region3: #{tpu_custom_call.1} parent=1 // loop_header
      %s27 = sphi 0, %s31
      %p28 = scmp.ge.s32.totalorder %s27, 4
      %s37 = sphi 0, %s39
      %s40 = sphi 0, %s37
      %s41 = sphi 0, %s40
      %s57 = sphi 0, %s41
      %s61 = sphi 0, %s61
      %s63 = sphi 0, %s61
      %s64 = sphi 0, %s63
      %s78 = sphi 0, %s64
      %s82 = sphi 0, %s82
      %s84 = sphi 0, %s82
      %s85 = sphi 0, %s84
      %s99 = sphi 0, %s85
      %s103 = sphi 0, %s103
      %s105 = sphi 0, %s103
      %s106 = sphi 0, %s105
      %s120 = sphi 0, %s106
      %s124 = sphi 0, %s124
      %s126 = sphi 0, %s124
      %s127 = sphi 0, %s126
      %s141 = sphi 0, %s127
      %s145 = sphi 0, %s145
      %s147 = sphi 0, %s145
      %s148 = sphi 0, %s147
      %s162 = sphi 0, %s148
      %s166 = sphi 0, %s166
      %s168 = sphi 0, %s166
      %s169 = sphi 0, %s168
      %s183 = sphi 0, %s169
      %s187 = sphi 0, %s187
      %s189 = sphi 0, %s187
      %s190 = sphi 0, %s189
      %s204 = sphi 0, %s190
      %s208 = sphi 0, %s208
      %s210 = sphi 0, %s208
      %s211 = sphi 0, %s210
      %s225 = sphi 0, %s211
      %s229 = sphi 0, %s229
      %s231 = sphi 0, %s229
      %s232 = sphi 0, %s231
      %s246 = sphi 0, %s232
      %s250 = sphi 0, %s250
      %s252 = sphi 0, %s250
      %s253 = sphi 0, %s252
      %s267 = sphi 0, %s253
      %s271 = sphi 0, %s271
      %s273 = sphi 0, %s271
      %s274 = sphi 0, %s273
      %s288 = sphi 0, %s274
      %s292 = sphi 0, %s292
      %s294 = sphi 0, %s292
      %s295 = sphi 0, %s294
      %s309 = sphi 0, %s295
      %s313 = sphi 0, %s313
      %s315 = sphi 0, %s313
      %s316 = sphi 0, %s315
      %s330 = sphi 0, %s316
      %s334 = sphi 0, %s334
      %s336 = sphi 0, %s334
      %s337 = sphi 0, %s336
      %s351 = sphi 0, %s337
      %s355 = sphi 0, %s355
      %s357 = sphi 0, %s355
      %s358 = sphi 0, %s357
      %s372 = sphi 0, %s358
      %s378 = sphi 0, %s380
      %s381 = sphi 0, %s378
      %s382 = sphi 0, %s381
      %s398 = sphi 0, %s382
    $region4: #{tpu_custom_call.1} parent=1 // loop_header_branch
      %30 = sbr.rel (%p28) target = $region8
    $region5: #{tpu_custom_call.1} parent=1 // loop_body
      %s32 = ssub.s32 %s27, 1
      %s33 = ssub.s32 %s27, 2
      %s34 = sadd.s32 %s27, 1
      %s35 = ssub.s32 %s27, %s34
      %p36 = scmp.eq.s32.totalorder %s35, 0
      %s38 = sadd.s32 %s37, 1
      %s39 = scalar_select %p36, %s37, %s38
      %p42 = pneg %p36
      %p43 = scmp.eq.s32.totalorder %s27, 1
      %p44 = por %p42, %p43
      %p45 = scmp.ne.s32.totalorder %s37, %s40
      %p46 = scmp.eq.s32.totalorder %s27, 0
      %p47 = por %p45, %p46
      %p48 = scmp.ne.s32.totalorder %s37, %s40
      %p49 = scmp.eq.s32.totalorder %s32, 1
      %p50 = por %p48, %p49
      %p51 = scmp.ne.s32.totalorder %s40, %s41
      %p52 = scmp.eq.s32.totalorder %s32, 0
      %p53 = por %p51, %p52
      %p54 = scmp.ne.s32.totalorder %s40, %s41
      %p55 = scmp.eq.s32.totalorder %s33, 1
      %p56 = por %p54, %p55
      %p58 = scmp.ne.s32.totalorder %s41, %s57
      %p59 = scmp.eq.s32.totalorder %s33, 0
      %p60 = por %p58, %p59
      %s62 = sadd.s32 %s61, 1
      %p65 = scmp.eq.s32.totalorder %s27, 1
      %p66 = scmp.ne.s32.totalorder %s61, %s63
      %p67 = scmp.eq.s32.totalorder %s27, 0
      %p68 = por %p66, %p67
      %p69 = scmp.ne.s32.totalorder %s61, %s63
      %p70 = scmp.eq.s32.totalorder %s32, 1
      %p71 = por %p69, %p70
      %p72 = scmp.ne.s32.totalorder %s63, %s64
      %p73 = scmp.eq.s32.totalorder %s32, 0
      %p74 = por %p72, %p73
      %p75 = scmp.ne.s32.totalorder %s63, %s64
      %p76 = scmp.eq.s32.totalorder %s33, 1
      %p77 = por %p75, %p76
      %p79 = scmp.ne.s32.totalorder %s64, %s78
      %p80 = scmp.eq.s32.totalorder %s33, 0
      %p81 = por %p79, %p80
      %s83 = sadd.s32 %s82, 1
      %p86 = scmp.eq.s32.totalorder %s27, 1
      %p87 = scmp.ne.s32.totalorder %s82, %s84
      %p88 = scmp.eq.s32.totalorder %s27, 0
      %p89 = por %p87, %p88
      %p90 = scmp.ne.s32.totalorder %s82, %s84
      %p91 = scmp.eq.s32.totalorder %s32, 1
      %p92 = por %p90, %p91
      %p93 = scmp.ne.s32.totalorder %s84, %s85
      %p94 = scmp.eq.s32.totalorder %s32, 0
      %p95 = por %p93, %p94
      %p96 = scmp.ne.s32.totalorder %s84, %s85
      %p97 = scmp.eq.s32.totalorder %s33, 1
      %p98 = por %p96, %p97
      %p100 = scmp.ne.s32.totalorder %s85, %s99
      %p101 = scmp.eq.s32.totalorder %s33, 0
      %p102 = por %p100, %p101
      %s104 = sadd.s32 %s103, 1
      %p107 = scmp.eq.s32.totalorder %s27, 1
      %p108 = scmp.ne.s32.totalorder %s103, %s105
      %p109 = scmp.eq.s32.totalorder %s27, 0
      %p110 = por %p108, %p109
      %p111 = scmp.ne.s32.totalorder %s103, %s105
      %p112 = scmp.eq.s32.totalorder %s32, 1
      %p113 = por %p111, %p112
      %p114 = scmp.ne.s32.totalorder %s105, %s106
      %p115 = scmp.eq.s32.totalorder %s32, 0
      %p116 = por %p114, %p115
      %p117 = scmp.ne.s32.totalorder %s105, %s106
      %p118 = scmp.eq.s32.totalorder %s33, 1
      %p119 = por %p117, %p118
      %p121 = scmp.ne.s32.totalorder %s106, %s120
      %p122 = scmp.eq.s32.totalorder %s33, 0
      %p123 = por %p121, %p122
      %s125 = sadd.s32 %s124, 1
      %p128 = scmp.eq.s32.totalorder %s27, 1
      %p129 = scmp.ne.s32.totalorder %s124, %s126
      %p130 = scmp.eq.s32.totalorder %s27, 0
      %p131 = por %p129, %p130
      %p132 = scmp.ne.s32.totalorder %s124, %s126
      %p133 = scmp.eq.s32.totalorder %s32, 1
      %p134 = por %p132, %p133
      %p135 = scmp.ne.s32.totalorder %s126, %s127
      %p136 = scmp.eq.s32.totalorder %s32, 0
      %p137 = por %p135, %p136
      %p138 = scmp.ne.s32.totalorder %s126, %s127
      %p139 = scmp.eq.s32.totalorder %s33, 1
      %p140 = por %p138, %p139
      %p142 = scmp.ne.s32.totalorder %s127, %s141
      %p143 = scmp.eq.s32.totalorder %s33, 0
      %p144 = por %p142, %p143
      %s146 = sadd.s32 %s145, 1
      %p149 = scmp.eq.s32.totalorder %s27, 1
      %p150 = scmp.ne.s32.totalorder %s145, %s147
      %p151 = scmp.eq.s32.totalorder %s27, 0
      %p152 = por %p150, %p151
      %p153 = scmp.ne.s32.totalorder %s145, %s147
      %p154 = scmp.eq.s32.totalorder %s32, 1
      %p155 = por %p153, %p154
      %p156 = scmp.ne.s32.totalorder %s147, %s148
      %p157 = scmp.eq.s32.totalorder %s32, 0
      %p158 = por %p156, %p157
      %p159 = scmp.ne.s32.totalorder %s147, %s148
      %p160 = scmp.eq.s32.totalorder %s33, 1
      %p161 = por %p159, %p160
      %p163 = scmp.ne.s32.totalorder %s148, %s162
      %p164 = scmp.eq.s32.totalorder %s33, 0
      %p165 = por %p163, %p164
      %s167 = sadd.s32 %s166, 1
      %p170 = scmp.eq.s32.totalorder %s27, 1
      %p171 = scmp.ne.s32.totalorder %s166, %s168
      %p172 = scmp.eq.s32.totalorder %s27, 0
      %p173 = por %p171, %p172
      %p174 = scmp.ne.s32.totalorder %s166, %s168
      %p175 = scmp.eq.s32.totalorder %s32, 1
      %p176 = por %p174, %p175
      %p177 = scmp.ne.s32.totalorder %s168, %s169
      %p178 = scmp.eq.s32.totalorder %s32, 0
      %p179 = por %p177, %p178
      %p180 = scmp.ne.s32.totalorder %s168, %s169
      %p181 = scmp.eq.s32.totalorder %s33, 1
      %p182 = por %p180, %p181
      %p184 = scmp.ne.s32.totalorder %s169, %s183
      %p185 = scmp.eq.s32.totalorder %s33, 0
      %p186 = por %p184, %p185
      %s188 = sadd.s32 %s187, 1
      %p191 = scmp.eq.s32.totalorder %s27, 1
      %p192 = scmp.ne.s32.totalorder %s187, %s189
      %p193 = scmp.eq.s32.totalorder %s27, 0
      %p194 = por %p192, %p193
      %p195 = scmp.ne.s32.totalorder %s187, %s189
      %p196 = scmp.eq.s32.totalorder %s32, 1
      %p197 = por %p195, %p196
      %p198 = scmp.ne.s32.totalorder %s189, %s190
      %p199 = scmp.eq.s32.totalorder %s32, 0
      %p200 = por %p198, %p199
      %p201 = scmp.ne.s32.totalorder %s189, %s190
      %p202 = scmp.eq.s32.totalorder %s33, 1
      %p203 = por %p201, %p202
      %p205 = scmp.ne.s32.totalorder %s190, %s204
      %p206 = scmp.eq.s32.totalorder %s33, 0
      %p207 = por %p205, %p206
      %s209 = sadd.s32 %s208, 1
      %p212 = scmp.eq.s32.totalorder %s27, 1
      %p213 = scmp.ne.s32.totalorder %s208, %s210
      %p214 = scmp.eq.s32.totalorder %s27, 0
      %p215 = por %p213, %p214
      %p216 = scmp.ne.s32.totalorder %s208, %s210
      %p217 = scmp.eq.s32.totalorder %s32, 1
      %p218 = por %p216, %p217
      %p219 = scmp.ne.s32.totalorder %s210, %s211
      %p220 = scmp.eq.s32.totalorder %s32, 0
      %p221 = por %p219, %p220
      %p222 = scmp.ne.s32.totalorder %s210, %s211
      %p223 = scmp.eq.s32.totalorder %s33, 1
      %p224 = por %p222, %p223
      %p226 = scmp.ne.s32.totalorder %s211, %s225
      %p227 = scmp.eq.s32.totalorder %s33, 0
      %p228 = por %p226, %p227
      %s230 = sadd.s32 %s229, 1
      %p233 = scmp.eq.s32.totalorder %s27, 1
      %p234 = scmp.ne.s32.totalorder %s229, %s231
      %p235 = scmp.eq.s32.totalorder %s27, 0
      %p236 = por %p234, %p235
      %p237 = scmp.ne.s32.totalorder %s229, %s231
      %p238 = scmp.eq.s32.totalorder %s32, 1
      %p239 = por %p237, %p238
      %p240 = scmp.ne.s32.totalorder %s231, %s232
      %p241 = scmp.eq.s32.totalorder %s32, 0
      %p242 = por %p240, %p241
      %p243 = scmp.ne.s32.totalorder %s231, %s232
      %p244 = scmp.eq.s32.totalorder %s33, 1
      %p245 = por %p243, %p244
      %p247 = scmp.ne.s32.totalorder %s232, %s246
      %p248 = scmp.eq.s32.totalorder %s33, 0
      %p249 = por %p247, %p248
      %s251 = sadd.s32 %s250, 1
      %p254 = scmp.eq.s32.totalorder %s27, 1
      %p255 = scmp.ne.s32.totalorder %s250, %s252
      %p256 = scmp.eq.s32.totalorder %s27, 0
      %p257 = por %p255, %p256
      %p258 = scmp.ne.s32.totalorder %s250, %s252
      %p259 = scmp.eq.s32.totalorder %s32, 1
      %p260 = por %p258, %p259
      %p261 = scmp.ne.s32.totalorder %s252, %s253
      %p262 = scmp.eq.s32.totalorder %s32, 0
      %p263 = por %p261, %p262
      %p264 = scmp.ne.s32.totalorder %s252, %s253
      %p265 = scmp.eq.s32.totalorder %s33, 1
      %p266 = por %p264, %p265
      %p268 = scmp.ne.s32.totalorder %s253, %s267
      %p269 = scmp.eq.s32.totalorder %s33, 0
      %p270 = por %p268, %p269
      %s272 = sadd.s32 %s271, 1
      %p275 = scmp.eq.s32.totalorder %s27, 1
      %p276 = scmp.ne.s32.totalorder %s271, %s273
      %p277 = scmp.eq.s32.totalorder %s27, 0
      %p278 = por %p276, %p277
      %p279 = scmp.ne.s32.totalorder %s271, %s273
      %p280 = scmp.eq.s32.totalorder %s32, 1
      %p281 = por %p279, %p280
      %p282 = scmp.ne.s32.totalorder %s273, %s274
      %p283 = scmp.eq.s32.totalorder %s32, 0
      %p284 = por %p282, %p283
      %p285 = scmp.ne.s32.totalorder %s273, %s274
      %p286 = scmp.eq.s32.totalorder %s33, 1
      %p287 = por %p285, %p286
      %p289 = scmp.ne.s32.totalorder %s274, %s288
      %p290 = scmp.eq.s32.totalorder %s33, 0
      %p291 = por %p289, %p290
      %s293 = sadd.s32 %s292, 1
      %p296 = scmp.eq.s32.totalorder %s27, 1
      %p297 = scmp.ne.s32.totalorder %s292, %s294
      %p298 = scmp.eq.s32.totalorder %s27, 0
      %p299 = por %p297, %p298
      %p300 = scmp.ne.s32.totalorder %s292, %s294
      %p301 = scmp.eq.s32.totalorder %s32, 1
      %p302 = por %p300, %p301
      %p303 = scmp.ne.s32.totalorder %s294, %s295
      %p304 = scmp.eq.s32.totalorder %s32, 0
      %p305 = por %p303, %p304
      %p306 = scmp.ne.s32.totalorder %s294, %s295
      %p307 = scmp.eq.s32.totalorder %s33, 1
      %p308 = por %p306, %p307
      %p310 = scmp.ne.s32.totalorder %s295, %s309
      %p311 = scmp.eq.s32.totalorder %s33, 0
      %p312 = por %p310, %p311
      %s314 = sadd.s32 %s313, 1
      %p317 = scmp.eq.s32.totalorder %s27, 1
      %p318 = scmp.ne.s32.totalorder %s313, %s315
      %p319 = scmp.eq.s32.totalorder %s27, 0
      %p320 = por %p318, %p319
      %p321 = scmp.ne.s32.totalorder %s313, %s315
      %p322 = scmp.eq.s32.totalorder %s32, 1
      %p323 = por %p321, %p322
      %p324 = scmp.ne.s32.totalorder %s315, %s316
      %p325 = scmp.eq.s32.totalorder %s32, 0
      %p326 = por %p324, %p325
      %p327 = scmp.ne.s32.totalorder %s315, %s316
      %p328 = scmp.eq.s32.totalorder %s33, 1
      %p329 = por %p327, %p328
      %p331 = scmp.ne.s32.totalorder %s316, %s330
      %p332 = scmp.eq.s32.totalorder %s33, 0
      %p333 = por %p331, %p332
      %s335 = sadd.s32 %s334, 1
      %p338 = scmp.eq.s32.totalorder %s27, 1
      %p339 = scmp.ne.s32.totalorder %s334, %s336
      %p340 = scmp.eq.s32.totalorder %s27, 0
      %p341 = por %p339, %p340
      %p342 = scmp.ne.s32.totalorder %s334, %s336
      %p343 = scmp.eq.s32.totalorder %s32, 1
      %p344 = por %p342, %p343
      %p345 = scmp.ne.s32.totalorder %s336, %s337
      %p346 = scmp.eq.s32.totalorder %s32, 0
      %p347 = por %p345, %p346
      %p348 = scmp.ne.s32.totalorder %s336, %s337
      %p349 = scmp.eq.s32.totalorder %s33, 1
      %p350 = por %p348, %p349
      %p352 = scmp.ne.s32.totalorder %s337, %s351
      %p353 = scmp.eq.s32.totalorder %s33, 0
      %p354 = por %p352, %p353
      %s356 = sadd.s32 %s355, 1
      %p359 = scmp.eq.s32.totalorder %s27, 1
      %p360 = scmp.ne.s32.totalorder %s355, %s357
      %p361 = scmp.eq.s32.totalorder %s27, 0
      %p362 = por %p360, %p361
      %p363 = scmp.ne.s32.totalorder %s355, %s357
      %p364 = scmp.eq.s32.totalorder %s32, 1
      %p365 = por %p363, %p364
      %p366 = scmp.ne.s32.totalorder %s357, %s358
      %p367 = scmp.eq.s32.totalorder %s32, 0
      %p368 = por %p366, %p367
      %p369 = scmp.ne.s32.totalorder %s357, %s358
      %p370 = scmp.eq.s32.totalorder %s33, 1
      %p371 = por %p369, %p370
      %p373 = scmp.ne.s32.totalorder %s358, %s372
      %p374 = scmp.eq.s32.totalorder %s33, 0
      %p375 = por %p373, %p374
      %s376 = ssub.s32 %s27, %s34
      %p377 = scmp.eq.s32.totalorder %s376, 0
      %s379 = sadd.s32 %s378, 1
      %s380 = scalar_select %p377, %s378, %s379
      %p383 = pneg %p377
      %p384 = scmp.eq.s32.totalorder %s27, 1
      %p385 = por %p383, %p384
      %p386 = scmp.ne.s32.totalorder %s378, %s381
      %p387 = scmp.eq.s32.totalorder %s27, 0
      %p388 = por %p386, %p387
      %p389 = scmp.ne.s32.totalorder %s378, %s381
      %p390 = scmp.eq.s32.totalorder %s32, 1
      %p391 = por %p389, %p390
      %p392 = scmp.ne.s32.totalorder %s381, %s382
      %p393 = scmp.eq.s32.totalorder %s32, 0
      %p394 = por %p392, %p393
      %p395 = scmp.ne.s32.totalorder %s381, %s382
      %p396 = scmp.eq.s32.totalorder %s33, 1
      %p397 = por %p395, %p396
      %p399 = scmp.ne.s32.totalorder %s382, %s398
      %p400 = scmp.eq.s32.totalorder %s33, 0
      %p401 = por %p399, %p400
      %p402 = scmp.le.s32.totalorder 1, %s27
      %p403 = scmp.lt.s32.totalorder %s27, 3
      %p404 = pnand %p402, %p403
      %p405 = pneg %p404
      // Predicated region
      $region9: #{tpu_custom_call.1} parent=5 // pred_check
        _
      $region10: #{tpu_custom_call.1} parent=5 // pred_check_branch
        %407 = sbr.rel (%p404) target = $region12
      $region11: #{tpu_custom_call.1} parent=5 // pred_region
        %s408 = ssub.s32 %s27, 1
        // Predicated region
        $region13: #{tpu_custom_call.1} parent=11 // pred_check
          %p409 = pneg %p74
        $region14: #{tpu_custom_call.1} parent=11 // pred_check_branch
          %411 = sbr.rel (%p409) target = $region16
        $region15: #{tpu_custom_call.1} parent=11 // pred_region
          %s413 = ssub.s32 256, 256
          %414 = vsyncadd [#allocation3], %s413
          %s415 = sshll.u32 [#allocation2], 4
          %s416 = int_to_ptr.vmem [resolvable:$true] %s415
          %421 = dma.hbm_to_vmem [thread:$0]  %s1, 256, %s416, [#allocation3], 128, 128, 8
        $region16: #{tpu_custom_call.1} parent=11 // pred_fallthru
          _
        // Predicated region
        $region17: #{tpu_custom_call.1} parent=11 // pred_check
          %p422 = pneg %p95
        $region18: #{tpu_custom_call.1} parent=11 // pred_check_branch
          %424 = sbr.rel (%p422) target = $region20
        $region19: #{tpu_custom_call.1} parent=11 // pred_region
          _
        $region20: #{tpu_custom_call.1} parent=11 // pred_fallthru
          _
        // Predicated region
        $region21: #{tpu_custom_call.1} parent=11 // pred_check
          %p425 = pneg %p116
        $region22: #{tpu_custom_call.1} parent=11 // pred_check_branch
          %427 = sbr.rel (%p425) target = $region24
        $region23: #{tpu_custom_call.1} parent=11 // pred_region
          _
        $region24: #{tpu_custom_call.1} parent=11 // pred_fallthru
          _
        // Predicated region
        $region25: #{tpu_custom_call.1} parent=11 // pred_check
          %p428 = pneg %p137
        $region26: #{tpu_custom_call.1} parent=11 // pred_check_branch
          %430 = sbr.rel (%p428) target = $region28
        $region27: #{tpu_custom_call.1} parent=11 // pred_region
          _
        $region28: #{tpu_custom_call.1} parent=11 // pred_fallthru
          _
        // Predicated region
        $region29: #{tpu_custom_call.1} parent=11 // pred_check
          %p431 = pneg %p158
        $region30: #{tpu_custom_call.1} parent=11 // pred_check_branch
          %433 = sbr.rel (%p431) target = $region32
        $region31: #{tpu_custom_call.1} parent=11 // pred_region
          _
        $region32: #{tpu_custom_call.1} parent=11 // pred_fallthru
          _
        // Predicated region
        $region33: #{tpu_custom_call.1} parent=11 // pred_check
          %p434 = pneg %p179
        $region34: #{tpu_custom_call.1} parent=11 // pred_check_branch
          %436 = sbr.rel (%p434) target = $region36
        $region35: #{tpu_custom_call.1} parent=11 // pred_region
          %s438 = ssub.s32 512, 512
          %439 = vsyncadd [#allocation6], %s438
          %s440 = sshll.u32 [#allocation5], 4
          %s441 = int_to_ptr.vmem [resolvable:$true] %s440
          %446 = dma.hbm_to_vmem [thread:$0]  %s6, 512, %s441, [#allocation6], 128, 128, 8
        $region36: #{tpu_custom_call.1} parent=11 // pred_fallthru
          _
        // Predicated region
        $region37: #{tpu_custom_call.1} parent=11 // pred_check
          %p447 = pneg %p200
        $region38: #{tpu_custom_call.1} parent=11 // pred_check_branch
          %449 = sbr.rel (%p447) target = $region40
        $region39: #{tpu_custom_call.1} parent=11 // pred_region
          _
        $region40: #{tpu_custom_call.1} parent=11 // pred_fallthru
          _
        // Predicated region
        $region41: #{tpu_custom_call.1} parent=11 // pred_check
          %p450 = pneg %p221
        $region42: #{tpu_custom_call.1} parent=11 // pred_check_branch
          %452 = sbr.rel (%p450) target = $region44
        $region43: #{tpu_custom_call.1} parent=11 // pred_region
          _
        $region44: #{tpu_custom_call.1} parent=11 // pred_fallthru
          _
        // Predicated region
        $region45: #{tpu_custom_call.1} parent=11 // pred_check
          %p453 = pneg %p242
        $region46: #{tpu_custom_call.1} parent=11 // pred_check_branch
          %455 = sbr.rel (%p453) target = $region48
        $region47: #{tpu_custom_call.1} parent=11 // pred_region
          _
        $region48: #{tpu_custom_call.1} parent=11 // pred_fallthru
          _
        // Predicated region
        $region49: #{tpu_custom_call.1} parent=11 // pred_check
          %p456 = pneg %p263
        $region50: #{tpu_custom_call.1} parent=11 // pred_check_branch
          %458 = sbr.rel (%p456) target = $region52
        $region51: #{tpu_custom_call.1} parent=11 // pred_region
          %s460 = ssub.s32 512, 512
          %461 = vsyncadd [#allocation6], %s460
          %s462 = sshll.u32 [#allocation7], 4
          %s463 = int_to_ptr.vmem [resolvable:$true] %s462
          %468 = dma.hbm_to_vmem [thread:$0]  %s10, 512, %s463, [#allocation6], 128, 128, 8
        $region52: #{tpu_custom_call.1} parent=11 // pred_fallthru
          _
        // Predicated region
        $region53: #{tpu_custom_call.1} parent=11 // pred_check
          %p469 = pneg %p284
        $region54: #{tpu_custom_call.1} parent=11 // pred_check_branch
          %471 = sbr.rel (%p469) target = $region56
        $region55: #{tpu_custom_call.1} parent=11 // pred_region
          _
        $region56: #{tpu_custom_call.1} parent=11 // pred_fallthru
          _
        // Predicated region
        $region57: #{tpu_custom_call.1} parent=11 // pred_check
          %p472 = pneg %p305
        $region58: #{tpu_custom_call.1} parent=11 // pred_check_branch
          %474 = sbr.rel (%p472) target = $region60
        $region59: #{tpu_custom_call.1} parent=11 // pred_region
          _
        $region60: #{tpu_custom_call.1} parent=11 // pred_fallthru
          _
        // Predicated region
        $region61: #{tpu_custom_call.1} parent=11 // pred_check
          %p475 = pneg %p326
        $region62: #{tpu_custom_call.1} parent=11 // pred_check_branch
          %477 = sbr.rel (%p475) target = $region64
        $region63: #{tpu_custom_call.1} parent=11 // pred_region
          _
        $region64: #{tpu_custom_call.1} parent=11 // pred_fallthru
          _
        // Predicated region
        $region65: #{tpu_custom_call.1} parent=11 // pred_check
          %p478 = pneg %p347
        $region66: #{tpu_custom_call.1} parent=11 // pred_check_branch
          %480 = sbr.rel (%p478) target = $region68
        $region67: #{tpu_custom_call.1} parent=11 // pred_region
          _
        $region68: #{tpu_custom_call.1} parent=11 // pred_fallthru
          _
        // Predicated region
        $region69: #{tpu_custom_call.1} parent=11 // pred_check
          %p481 = pneg %p368
        $region70: #{tpu_custom_call.1} parent=11 // pred_check_branch
          %483 = sbr.rel (%p481) target = $region72
        $region71: #{tpu_custom_call.1} parent=11 // pred_region
          _
        $region72: #{tpu_custom_call.1} parent=11 // pred_fallthru
          _
      $region12: #{tpu_custom_call.1} parent=5 // pred_fallthru
        _
      %p484 = scmp.lt.s32.totalorder %s27, 2
      // Predicated region
      $region73: #{tpu_custom_call.1} parent=5 // pred_check
        %p485 = pneg %p484
      $region74: #{tpu_custom_call.1} parent=5 // pred_check_branch
        %487 = sbr.rel (%p485) target = $region76
      $region75: #{tpu_custom_call.1} parent=5 // pred_region
        // Predicated region
        $region77: #{tpu_custom_call.1} parent=75 // pred_check
          %p488 = pneg %p47
        $region78: #{tpu_custom_call.1} parent=75 // pred_check_branch
          %490 = sbr.rel (%p488) target = $region80
        $region79: #{tpu_custom_call.1} parent=75 // pred_region
          %p491 = scmp.lt.s32.totalorder %s27, 1
          %s492 = scalar_select %p491, %s27, 1
          %s493 = smul.addr %s492, 2
          %s494 = smul.addr %s493, 8
          %s495 = scalar_lea.vmem %s0, %s494
        $region80: #{tpu_custom_call.1} parent=75 // pred_fallthru
          _
      $region76: #{tpu_custom_call.1} parent=5 // pred_fallthru
        _
      %p496 = scmp.le.s32.totalorder 1, %s27
      %p497 = scmp.lt.s32.totalorder %s27, 3
      %p498 = pnand %p496, %p497
      %p499 = pneg %p498
      // Predicated region
      $region81: #{tpu_custom_call.1} parent=5 // pred_check
        _
      $region82: #{tpu_custom_call.1} parent=5 // pred_check_branch
        %501 = sbr.rel (%p498) target = $region84
      $region83: #{tpu_custom_call.1} parent=5 // pred_region
        %s502 = ssub.s32 %s27, 1
        // Predicated region
        $region85: #{tpu_custom_call.1} parent=83 // pred_check
          %p503 = pneg %p74
        $region86: #{tpu_custom_call.1} parent=83 // pred_check_branch
          %505 = sbr.rel (%p503) target = $region88
        $region87: #{tpu_custom_call.1} parent=83 // pred_region
          %506 = dma.done [#allocation3], 256
        $region88: #{tpu_custom_call.1} parent=83 // pred_fallthru
          _
        // Predicated region
        $region89: #{tpu_custom_call.1} parent=83 // pred_check
          %p507 = pneg %p179
        $region90: #{tpu_custom_call.1} parent=83 // pred_check_branch
          %509 = sbr.rel (%p507) target = $region92
        $region91: #{tpu_custom_call.1} parent=83 // pred_region
          %510 = dma.done [#allocation6], 512
        $region92: #{tpu_custom_call.1} parent=83 // pred_fallthru
          _
        // Predicated region
        $region93: #{tpu_custom_call.1} parent=83 // pred_check
          %p511 = pneg %p263
        $region94: #{tpu_custom_call.1} parent=83 // pred_check_branch
          %513 = sbr.rel (%p511) target = $region96
        $region95: #{tpu_custom_call.1} parent=83 // pred_region
          %514 = dma.done [#allocation6], 512
        $region96: #{tpu_custom_call.1} parent=83 // pred_fallthru
          _
        %p515 = scmp.lt.s32.totalorder %s32, 1
        %s516 = scalar_select %p515, %s32, 1
        %s517 = smul.addr %s516, 2
        %s518 = smul.addr %s517, 8
        %s519 = scalar_lea.vmem %s0, %s518
        %p520 = pneg %p53
        %p521 = pneg %p50
        %p522 = pneg %p74
        %p523 = pneg %p71
        %p524 = pneg %p95
        %p525 = pneg %p92
        %p526 = pneg %p116
        %p527 = pneg %p113
        %p528 = pneg %p137
        %p529 = pneg %p134
        %p530 = pneg %p158
        %p531 = pneg %p155
        %p532 = pneg %p179
        %p533 = pneg %p176
        %p534 = pneg %p200
        %p535 = pneg %p197
        %p536 = pneg %p221
        %p537 = pneg %p218
        %p538 = pneg %p242
        %p539 = pneg %p239
        %p540 = pneg %p263
        %p541 = pneg %p260
        %p542 = pneg %p284
        %p543 = pneg %p281
        %p544 = pneg %p305
        %p545 = pneg %p302
        %p546 = pneg %p326
        %p547 = pneg %p323
        %p548 = pneg %p347
        %p549 = pneg %p344
        %p550 = pneg %p368
        %p551 = pneg %p365
        %p552 = pneg %p394
        %p553 = pneg %p391
        %s554 = sand.u32 %s381, 1
        %s555 = scalar_lea.sflag [#allocation4], %s554
        %s556 = sand.u32 %s381, 1
        %s557 = smul.addr %s556, 16
        %s558 = scalar_lea.vmem [#allocation8], %s557
        %p559 = scmp.lt.s32.totalorder %s32, 1
        %s560 = scalar_select %p559, %s32, 1
        %s561 = smul.addr %s560, 2
        %s562 = smul.addr %s561, 8
        %s563 = scalar_lea.vmem %s0, %s562
        %v564 = vld [vmem:[%s563] sm:$0xff]
        %v565 = vld [vmem:[%s563 + $0x8] sm:$0xff]
        %v566 = vld [vmem:[#allocation2] sm:$0xff]
        %v567 = vld [vmem:[#allocation2 + $0x8] sm:$0xff]
        %v568 = vadd.f32 %v564, %v566
        %v569 = vadd.f32 %v565, %v567
        %v570 = vld [vmem:[%s2] sm:$0xff]
        %v571 = vld [vmem:[%s2 + $0x8] sm:$0xff]
        %v572 = vld [vmem:[%s2 + $0x10] sm:$0xff]
        %v573 = vld [vmem:[%s2 + $0x18] sm:$0xff]
        %v574 = vld [vmem:[%s3] sm:$0x1]
        %v576 = vlaneseq
        %v577 = vshrl.u32 %v576, 7
        %v578 = vsub.s32 0, %v577
        %v579 = vrot.slane %v574, %v578
        %vm581 = vcmask 261120
        %v583 = vsel %vm581, %v568, 0
        %v586 = vsel %vm581, %v569, 0
        %588 = vmatprep.subr.mxu0 0.0
        %589 = vmatpush1.msra.mxu0 %v570
        %590 = vmatprep.subr.mxu0 0.0
        %591 = vmatpush1.msra.mxu0 %v571
        %592 = vmatprep.subr.mxu0 0.0
        %593 = vmatpush1.msra.mxu0 %v572
        %594 = vmatprep.subr.mxu0 0.0
        %595 = vmatpush1.msra.mxu0 %v573
        %596 = vmatprep.subr.mxu0 0.0
        %597 = vmatpush1.msra.mxu0 0.0
        %598 = vmatprep.subr.mxu0 0.0
        %599 = vmatpush1.msra.mxu0 0.0
        %600 = vmatprep.subr.mxu0 0.0
        %601 = vmatpush1.msra.mxu0 0.0
        %602 = vmatprep.subr.mxu0 0.0
        %603 = vmatpush1.msra.mxu0 0.0
        %604 = vmatprep.subr.mxu0 0.0
        %605 = vmatpush1.msra.mxu0 0.0
        %606 = vmatprep.subr.mxu0 0.0
        %607 = vmatpush1.msra.mxu0 0.0
        %608 = vmatprep.subr.mxu0 0.0
        %609 = vmatpush1.msra.mxu0 0.0
        %610 = vmatprep.subr.mxu0 0.0
        %611 = vmatpush1.msra.mxu0 0.0
        %612 = vmatprep.subr.mxu0 0.0
        %613 = vmatpush1.msra.mxu0 0.0
        %614 = vmatprep.subr.mxu0 0.0
        %615 = vmatpush1.msra.mxu0 0.0
        %616 = vmatprep.subr.mxu0 0.0
        %617 = vmatpush1.msra.mxu0 0.0
        %618 = vmatprep.subr.mxu0 0.0
        %619 = vmatpush1.msra.mxu0 0.0
        %620 = vmatprep.subr.mxu0 0.0
        %621 = vmatpush1.msra.mxu0 0.0
        %622 = vmatprep.subr.mxu0 0.0
        %623 = vmatpush1.msra.mxu0 0.0
        %624 = vmatprep.subr.mxu0 0.0
        %625 = vmatpush1.msra.mxu0 0.0
        %626 = vmatprep.subr.mxu0 0.0
        %627 = vmatpush1.msra.mxu0 0.0
        %628 = vmatprep.subr.mxu0 0.0
        %629 = vmatpush1.msra.mxu0 0.0
        %630 = vmatprep.subr.mxu0 0.0
        %631 = vmatpush1.msra.mxu0 0.0
        %632 = vmatprep.subr.mxu0 0.0
        %633 = vmatpush1.msra.mxu0 0.0
        %634 = vmatprep.subr.mxu0 0.0
        %635 = vmatpush1.msra.mxu0 0.0
        %636 = vmatprep.subr.mxu0 0.0
        %637 = vmatpush1.msra.mxu0 0.0
        %638 = vmatprep.subr.mxu0 0.0
        %639 = vmatpush1.msra.mxu0 0.0
        %640 = vmatprep.subr.mxu0 0.0
        %641 = vmatpush1.msra.mxu0 0.0
        %642 = vmatprep.subr.mxu0 0.0
        %643 = vmatpush1.msra.mxu0 0.0
        %644 = vmatprep.subr.mxu0 0.0
        %645 = vmatpush1.msra.mxu0 0.0
        %646 = vmatprep.subr.mxu0 0.0
        %647 = vmatpush1.msra.mxu0 0.0
        %648 = vmatprep.subr.mxu0 0.0
        %649 = vmatpush1.msra.mxu0 0.0
        %650 = vmatprep.subr.mxu0 0.0
        %651 = vmatpush1.msra.mxu0 0.0
        %652 = vmatprep.mubr.f32.mxu0 0.0
        %653 = vmatmul.mubr.f32.gmra.mrb[0].mxu0 %v583
        %v654 = vpop.f32.mrb[0].mxu0
        %v655 = vadd.f32 %v579, %v654
        %v656 = vpop.f32.mrb[0].mxu0
        %657 = vmatprep.mubr.f32.mxu0 0.0
        %658 = vmatmul.mubr.f32.gmra.mrb[0].mxu0 %v586
        %v659 = vpop.f32.mrb[0].mxu0
        %v660 = vadd.f32 %v579, %v659
        %v661 = vpop.f32.mrb[0].mxu0
        %662 = vdwg.mxu0
        %v663 = vld [vmem:[%s4] sm:$0xff]
        %v664 = vld [vmem:[%s4 + $0x8] sm:$0xff]
        %v665 = vld [vmem:[%s4 + $0x10] sm:$0xff]
        %v666 = vld [vmem:[%s4 + $0x18] sm:$0xff]
        %v667 = vld [vmem:[%s5] sm:$0x1]
        %v669 = vlaneseq
        %v670 = vshrl.u32 %v669, 7
        %v671 = vsub.s32 0, %v670
        %v672 = vrot.slane %v667, %v671
        %v675 = vsel %vm581, %v564, 0
        %v678 = vsel %vm581, %v565, 0
        %680 = vmatprep.subr.mxu0 0.0
        %681 = vmatpush1.msra.mxu0 %v663
        %682 = vmatprep.subr.mxu0 0.0
        %683 = vmatpush1.msra.mxu0 %v664
        %684 = vmatprep.subr.mxu0 0.0
        %685 = vmatpush1.msra.mxu0 %v665
        %686 = vmatprep.subr.mxu0 0.0
        %687 = vmatpush1.msra.mxu0 %v666
        %688 = vmatprep.subr.mxu0 0.0
        %689 = vmatpush1.msra.mxu0 0.0
        %690 = vmatprep.subr.mxu0 0.0
        %691 = vmatpush1.msra.mxu0 0.0
        %692 = vmatprep.subr.mxu0 0.0
        %693 = vmatpush1.msra.mxu0 0.0
        %694 = vmatprep.subr.mxu0 0.0
        %695 = vmatpush1.msra.mxu0 0.0
        %696 = vmatprep.subr.mxu0 0.0
        %697 = vmatpush1.msra.mxu0 0.0
        %698 = vmatprep.subr.mxu0 0.0
        %699 = vmatpush1.msra.mxu0 0.0
        %700 = vmatprep.subr.mxu0 0.0
        %701 = vmatpush1.msra.mxu0 0.0
        %702 = vmatprep.subr.mxu0 0.0
        %703 = vmatpush1.msra.mxu0 0.0
        %704 = vmatprep.subr.mxu0 0.0
        %705 = vmatpush1.msra.mxu0 0.0
        %706 = vmatprep.subr.mxu0 0.0
        %707 = vmatpush1.msra.mxu0 0.0
        %708 = vmatprep.subr.mxu0 0.0
        %709 = vmatpush1.msra.mxu0 0.0
        %710 = vmatprep.subr.mxu0 0.0
        %711 = vmatpush1.msra.mxu0 0.0
        %712 = vmatprep.subr.mxu0 0.0
        %713 = vmatpush1.msra.mxu0 0.0
        %714 = vmatprep.subr.mxu0 0.0
        %715 = vmatpush1.msra.mxu0 0.0
        %716 = vmatprep.subr.mxu0 0.0
        %717 = vmatpush1.msra.mxu0 0.0
        %718 = vmatprep.subr.mxu0 0.0
        %719 = vmatpush1.msra.mxu0 0.0
        %720 = vmatprep.subr.mxu0 0.0
        %721 = vmatpush1.msra.mxu0 0.0
        %722 = vmatprep.subr.mxu0 0.0
        %723 = vmatpush1.msra.mxu0 0.0
        %724 = vmatprep.subr.mxu0 0.0
        %725 = vmatpush1.msra.mxu0 0.0
        %726 = vmatprep.subr.mxu0 0.0
        %727 = vmatpush1.msra.mxu0 0.0
        %728 = vmatprep.subr.mxu0 0.0
        %729 = vmatpush1.msra.mxu0 0.0
        %730 = vmatprep.subr.mxu0 0.0
        %731 = vmatpush1.msra.mxu0 0.0
        %732 = vmatprep.subr.mxu0 0.0
        %733 = vmatpush1.msra.mxu0 0.0
        %734 = vmatprep.subr.mxu0 0.0
        %735 = vmatpush1.msra.mxu0 0.0
        %736 = vmatprep.subr.mxu0 0.0
        %737 = vmatpush1.msra.mxu0 0.0
        %738 = vmatprep.subr.mxu0 0.0
        %739 = vmatpush1.msra.mxu0 0.0
        %740 = vmatprep.subr.mxu0 0.0
        %741 = vmatpush1.msra.mxu0 0.0
        %742 = vmatprep.subr.mxu0 0.0
        %743 = vmatpush1.msra.mxu0 0.0
        %744 = vmatprep.mubr.f32.mxu0 0.0
        %745 = vmatmul.mubr.f32.gmra.mrb[0].mxu0 %v675
        %v746 = vpop.f32.mrb[0].mxu0
        %v747 = vadd.f32 %v672, %v746
        %v748 = vpop.f32.mrb[0].mxu0
        %749 = vmatprep.mubr.f32.mxu0 0.0
        %750 = vmatmul.mubr.f32.gmra.mrb[0].mxu0 %v678
        %v751 = vpop.f32.mrb[0].mxu0
        %v752 = vadd.f32 %v672, %v751
        %v753 = vpop.f32.mrb[0].mxu0
        %754 = vdwg.mxu0
        %757 = vrot.lane.b32.xlu0 %v655, 96
        %v758 = vpop.permute.xlu0 %757
        %759 = vrot.lane.b32.xlu0 %v660, 96
        %v760 = vpop.permute.xlu0 %759
        %vm761 = vcmask 64512
        %v762 = vsel %vm761, %v655, 0
        %v764 = vsel %vm761, %v660, 0
        %v766 = vsel %vm761, %v758, 0
        %v768 = vsel %vm761, %v760, 0
        %770 = vmatprep.subr.mxu0 0.0
        %771 = vmatpush1.xpose.msra.mxu0 %v766
        %772 = vmatprep.subr.mxu0 0.0
        %773 = vmatpush1.xpose.msra.mxu0 %v768
        %774 = vmatprep.subr.mxu0 0.0
        %775 = vmatpush1.xpose.msra.mxu0 0.0
        %776 = vmatprep.subr.mxu0 0.0
        %777 = vmatpush1.xpose.msra.mxu0 0.0
        %778 = vmatprep.subr.mxu0 0.0
        %779 = vmatpush1.xpose.msra.mxu0 0.0
        %780 = vmatprep.subr.mxu0 0.0
        %781 = vmatpush1.xpose.msra.mxu0 0.0
        %782 = vmatprep.subr.mxu0 0.0
        %783 = vmatpush1.xpose.msra.mxu0 0.0
        %784 = vmatprep.subr.mxu0 0.0
        %785 = vmatpush1.xpose.msra.mxu0 0.0
        %786 = vmatprep.subr.mxu0 0.0
        %787 = vmatpush1.xpose.msra.mxu0 0.0
        %788 = vmatprep.subr.mxu0 0.0
        %789 = vmatpush1.xpose.msra.mxu0 0.0
        %790 = vmatprep.subr.mxu0 0.0
        %791 = vmatpush1.xpose.msra.mxu0 0.0
        %792 = vmatprep.subr.mxu0 0.0
        %793 = vmatpush1.xpose.msra.mxu0 0.0
        %794 = vmatprep.subr.mxu0 0.0
        %795 = vmatpush1.xpose.msra.mxu0 0.0
        %796 = vmatprep.subr.mxu0 0.0
        %797 = vmatpush1.xpose.msra.mxu0 0.0
        %798 = vmatprep.subr.mxu0 0.0
        %799 = vmatpush1.xpose.msra.mxu0 0.0
        %800 = vmatprep.subr.mxu0 0.0
        %801 = vmatpush1.xpose.msra.mxu0 0.0
        %802 = vmatprep.subr.mxu0 0.0
        %803 = vmatpush1.xpose.msra.mxu0 0.0
        %804 = vmatprep.subr.mxu0 0.0
        %805 = vmatpush1.xpose.msra.mxu0 0.0
        %806 = vmatprep.subr.mxu0 0.0
        %807 = vmatpush1.xpose.msra.mxu0 0.0
        %808 = vmatprep.subr.mxu0 0.0
        %809 = vmatpush1.xpose.msra.mxu0 0.0
        %810 = vmatprep.subr.mxu0 0.0
        %811 = vmatpush1.xpose.msra.mxu0 0.0
        %812 = vmatprep.subr.mxu0 0.0
        %813 = vmatpush1.xpose.msra.mxu0 0.0
        %814 = vmatprep.subr.mxu0 0.0
        %815 = vmatpush1.xpose.msra.mxu0 0.0
        %816 = vmatprep.subr.mxu0 0.0
        %817 = vmatpush1.xpose.msra.mxu0 0.0
        %818 = vmatprep.subr.mxu0 0.0
        %819 = vmatpush1.xpose.msra.mxu0 0.0
        %820 = vmatprep.subr.mxu0 0.0
        %821 = vmatpush1.xpose.msra.mxu0 0.0
        %822 = vmatprep.subr.mxu0 0.0
        %823 = vmatpush1.xpose.msra.mxu0 0.0
        %824 = vmatprep.subr.mxu0 0.0
        %825 = vmatpush1.xpose.msra.mxu0 0.0
        %826 = vmatprep.subr.mxu0 0.0
        %827 = vmatpush1.xpose.msra.mxu0 0.0
        %828 = vmatprep.subr.mxu0 0.0
        %829 = vmatpush1.xpose.msra.mxu0 0.0
        %830 = vmatprep.subr.mxu0 0.0
        %831 = vmatpush1.xpose.msra.mxu0 0.0
        %832 = vmatprep.subr.mxu0 0.0
        %833 = vmatpush1.xpose.msra.mxu0 0.0
        %834 = vmatprep.mubr.f32.mxu0 0.0
        %835 = vmatmul.mubr.f32.gmra.mrb[0].mxu0 %v762
        %v836 = vpop.f32.mrb[0].mxu0
        %v837 = vadd.f32 0.0, %v836
        %v838 = vpop.f32.mrb[0].mxu0
        %839 = vmatprep.mubr.f32.mxu0 0.0
        %840 = vmatmul.mubr.f32.gmra.mrb[0].mxu0 %v764
        %v841 = vpop.f32.mrb[0].mxu0
        %v842 = vadd.f32 0.0, %v841
        %v843 = vpop.f32.mrb[0].mxu0
        %844 = vdwg.mxu0
        %v845 = vmul.f32 %v837, 0.35355338
        %v846 = vmul.f32 %v842, 0.35355338
        %vm847 = vcmask 130048
        %v848 = vsel %vm847, %v845, -inf
        %849 = vmax.xlane.f32.xlu0 %v848
        %v850 = vpop.xlane.xlu0 %849
        %v851 = vsel %vm847, %v846, -inf
        %852 = vmax.xlane.f32.xlu0 %v851
        %v853 = vpop.xlane.xlu0 %852
        %v854 = vsub.f32 %v845, %v850
        %v855 = vsub.f32 %v846, %v853
        %v856 = vmul.f32 %v854, 1.442695
        %v857 = vpow.pop %v856
        %v858 = vmul.f32 %v855, 1.442695
        %v859 = vpow.pop %v858
        %v860 = vsel %vm847, %v857, 0.0
        %861 = vadd.xlane.f32.xlu0 %v860
        %v862 = vpop.xlane.xlu0 %861
        %v863 = vsel %vm847, %v859, 0.0
        %864 = vadd.xlane.f32.xlu0 %v863
        %v865 = vpop.xlane.xlu0 %864
        %v866 = vrcp.pop %v862
        %v867 = vmul.f32 %v857, %v866
        %v868 = vrcp.pop %v865
        %v869 = vmul.f32 %v859, %v868
        %v871 = vsel %vm847, %v867, 0
        %v874 = vsel %vm847, %v869, 0
        %876 = vmatprep.subr.mxu0 0.0
        %877 = vmatpush1.msra.mxu0 %v747
        %878 = vmatprep.subr.mxu0 0.0
        %879 = vmatpush1.msra.mxu0 %v752
        %880 = vmatprep.subr.mxu0 0.0
        %881 = vmatpush1.msra.mxu0 0.0
        %882 = vmatprep.subr.mxu0 0.0
        %883 = vmatpush1.msra.mxu0 0.0
        %884 = vmatprep.subr.mxu0 0.0
        %885 = vmatpush1.msra.mxu0 0.0
        %886 = vmatprep.subr.mxu0 0.0
        %887 = vmatpush1.msra.mxu0 0.0
        %888 = vmatprep.subr.mxu0 0.0
        %889 = vmatpush1.msra.mxu0 0.0
        %890 = vmatprep.subr.mxu0 0.0
        %891 = vmatpush1.msra.mxu0 0.0
        %892 = vmatprep.subr.mxu0 0.0
        %893 = vmatpush1.msra.mxu0 0.0
        %894 = vmatprep.subr.mxu0 0.0
        %895 = vmatpush1.msra.mxu0 0.0
        %896 = vmatprep.subr.mxu0 0.0
        %897 = vmatpush1.msra.mxu0 0.0
        %898 = vmatprep.subr.mxu0 0.0
        %899 = vmatpush1.msra.mxu0 0.0
        %900 = vmatprep.subr.mxu0 0.0
        %901 = vmatpush1.msra.mxu0 0.0
        %902 = vmatprep.subr.mxu0 0.0
        %903 = vmatpush1.msra.mxu0 0.0
        %904 = vmatprep.subr.mxu0 0.0
        %905 = vmatpush1.msra.mxu0 0.0
        %906 = vmatprep.subr.mxu0 0.0
        %907 = vmatpush1.msra.mxu0 0.0
        %908 = vmatprep.subr.mxu0 0.0
        %909 = vmatpush1.msra.mxu0 0.0
        %910 = vmatprep.subr.mxu0 0.0
        %911 = vmatpush1.msra.mxu0 0.0
        %912 = vmatprep.subr.mxu0 0.0
        %913 = vmatpush1.msra.mxu0 0.0
        %914 = vmatprep.subr.mxu0 0.0
        %915 = vmatpush1.msra.mxu0 0.0
        %916 = vmatprep.subr.mxu0 0.0
        %917 = vmatpush1.msra.mxu0 0.0
        %918 = vmatprep.subr.mxu0 0.0
        %919 = vmatpush1.msra.mxu0 0.0
        %920 = vmatprep.subr.mxu0 0.0
        %921 = vmatpush1.msra.mxu0 0.0
        %922 = vmatprep.subr.mxu0 0.0
        %923 = vmatpush1.msra.mxu0 0.0
        %924 = vmatprep.subr.mxu0 0.0
        %925 = vmatpush1.msra.mxu0 0.0
        %926 = vmatprep.subr.mxu0 0.0
        %927 = vmatpush1.msra.mxu0 0.0
        %928 = vmatprep.subr.mxu0 0.0
        %929 = vmatpush1.msra.mxu0 0.0
        %930 = vmatprep.subr.mxu0 0.0
        %931 = vmatpush1.msra.mxu0 0.0
        %932 = vmatprep.subr.mxu0 0.0
        %933 = vmatpush1.msra.mxu0 0.0
        %934 = vmatprep.subr.mxu0 0.0
        %935 = vmatpush1.msra.mxu0 0.0
        %936 = vmatprep.subr.mxu0 0.0
        %937 = vmatpush1.msra.mxu0 0.0
        %938 = vmatprep.subr.mxu0 0.0
        %939 = vmatpush1.msra.mxu0 0.0
        %940 = vmatprep.mubr.f32.mxu0 0.0
        %941 = vmatmul.mubr.f32.gmra.mrb[0].mxu0 %v871
        %v942 = vpop.f32.mrb[0].mxu0
        %v943 = vadd.f32 0.0, %v942
        %v944 = vpop.f32.mrb[0].mxu0
        %945 = vmatprep.mubr.f32.mxu0 0.0
        %946 = vmatmul.mubr.f32.gmra.mrb[0].mxu0 %v874
        %v947 = vpop.f32.mrb[0].mxu0
        %v948 = vadd.f32 0.0, %v947
        %v949 = vpop.f32.mrb[0].mxu0
        %950 = vdwg.mxu0
        %951 = vrot.lane.b32.xlu0 %v655, 120
        %v952 = vpop.permute.xlu0 %951
        %953 = vrot.lane.b32.xlu0 %v660, 120
        %v954 = vpop.permute.xlu0 %953
        %955 = vrot.lane.b32.xlu0 %v655, 88
        %v956 = vpop.permute.xlu0 %955
        %957 = vrot.lane.b32.xlu0 %v660, 88
        %v958 = vpop.permute.xlu0 %957
        %v959 = vsel %vm761, %v952, 0
        %v961 = vsel %vm761, %v954, 0
        %v963 = vsel %vm761, %v956, 0
        %v965 = vsel %vm761, %v958, 0
        %967 = vmatprep.subr.mxu0 0.0
        %968 = vmatpush1.xpose.msra.mxu0 %v963
        %969 = vmatprep.subr.mxu0 0.0
        %970 = vmatpush1.xpose.msra.mxu0 %v965
        %971 = vmatprep.subr.mxu0 0.0
        %972 = vmatpush1.xpose.msra.mxu0 0.0
        %973 = vmatprep.subr.mxu0 0.0
        %974 = vmatpush1.xpose.msra.mxu0 0.0
        %975 = vmatprep.subr.mxu0 0.0
        %976 = vmatpush1.xpose.msra.mxu0 0.0
        %977 = vmatprep.subr.mxu0 0.0
        %978 = vmatpush1.xpose.msra.mxu0 0.0
        %979 = vmatprep.subr.mxu0 0.0
        %980 = vmatpush1.xpose.msra.mxu0 0.0
        %981 = vmatprep.subr.mxu0 0.0
        %982 = vmatpush1.xpose.msra.mxu0 0.0
        %983 = vmatprep.subr.mxu0 0.0
        %984 = vmatpush1.xpose.msra.mxu0 0.0
        %985 = vmatprep.subr.mxu0 0.0
        %986 = vmatpush1.xpose.msra.mxu0 0.0
        %987 = vmatprep.subr.mxu0 0.0
        %988 = vmatpush1.xpose.msra.mxu0 0.0
        %989 = vmatprep.subr.mxu0 0.0
        %990 = vmatpush1.xpose.msra.mxu0 0.0
        %991 = vmatprep.subr.mxu0 0.0
        %992 = vmatpush1.xpose.msra.mxu0 0.0
        %993 = vmatprep.subr.mxu0 0.0
        %994 = vmatpush1.xpose.msra.mxu0 0.0
        %995 = vmatprep.subr.mxu0 0.0
        %996 = vmatpush1.xpose.msra.mxu0 0.0
        %997 = vmatprep.subr.mxu0 0.0
        %998 = vmatpush1.xpose.msra.mxu0 0.0
        %999 = vmatprep.subr.mxu0 0.0
        %1000 = vmatpush1.xpose.msra.mxu0 0.0
        %1001 = vmatprep.subr.mxu0 0.0
        %1002 = vmatpush1.xpose.msra.mxu0 0.0
        %1003 = vmatprep.subr.mxu0 0.0
        %1004 = vmatpush1.xpose.msra.mxu0 0.0
        %1005 = vmatprep.subr.mxu0 0.0
        %1006 = vmatpush1.xpose.msra.mxu0 0.0
        %1007 = vmatprep.subr.mxu0 0.0
        %1008 = vmatpush1.xpose.msra.mxu0 0.0
        %1009 = vmatprep.subr.mxu0 0.0
        %1010 = vmatpush1.xpose.msra.mxu0 0.0
        %1011 = vmatprep.subr.mxu0 0.0
        %1012 = vmatpush1.xpose.msra.mxu0 0.0
        %1013 = vmatprep.subr.mxu0 0.0
        %1014 = vmatpush1.xpose.msra.mxu0 0.0
        %1015 = vmatprep.subr.mxu0 0.0
        %1016 = vmatpush1.xpose.msra.mxu0 0.0
        %1017 = vmatprep.subr.mxu0 0.0
        %1018 = vmatpush1.xpose.msra.mxu0 0.0
        %1019 = vmatprep.subr.mxu0 0.0
        %1020 = vmatpush1.xpose.msra.mxu0 0.0
        %1021 = vmatprep.subr.mxu0 0.0
        %1022 = vmatpush1.xpose.msra.mxu0 0.0
        %1023 = vmatprep.subr.mxu0 0.0
        %1024 = vmatpush1.xpose.msra.mxu0 0.0
        %1025 = vmatprep.subr.mxu0 0.0
        %1026 = vmatpush1.xpose.msra.mxu0 0.0
        %1027 = vmatprep.subr.mxu0 0.0
        %1028 = vmatpush1.xpose.msra.mxu0 0.0
        %1029 = vmatprep.subr.mxu0 0.0
        %1030 = vmatpush1.xpose.msra.mxu0 0.0
        %1031 = vmatprep.mubr.f32.mxu0 0.0
        %1032 = vmatmul.mubr.f32.gmra.mrb[0].mxu0 %v959
        %v1033 = vpop.f32.mrb[0].mxu0
        %v1034 = vadd.f32 0.0, %v1033
        %v1035 = vpop.f32.mrb[0].mxu0
        %1036 = vmatprep.mubr.f32.mxu0 0.0
        %1037 = vmatmul.mubr.f32.gmra.mrb[0].mxu0 %v961
        %v1038 = vpop.f32.mrb[0].mxu0
        %v1039 = vadd.f32 0.0, %v1038
        %v1040 = vpop.f32.mrb[0].mxu0
        %1041 = vdwg.mxu0
        %v1042 = vmul.f32 %v1034, 0.35355338
        %v1043 = vmul.f32 %v1039, 0.35355338
        %v1044 = vsel %vm847, %v1042, -inf
        %1045 = vmax.xlane.f32.xlu0 %v1044
        %v1046 = vpop.xlane.xlu0 %1045
        %v1047 = vsel %vm847, %v1043, -inf
        %1048 = vmax.xlane.f32.xlu0 %v1047
        %v1049 = vpop.xlane.xlu0 %1048
        %v1050 = vsub.f32 %v1042, %v1046
        %v1051 = vsub.f32 %v1043, %v1049
        %v1052 = vmul.f32 %v1050, 1.442695
        %v1053 = vpow.pop %v1052
        %v1054 = vmul.f32 %v1051, 1.442695
        %v1055 = vpow.pop %v1054
        %v1056 = vsel %vm847, %v1053, 0.0
        %1057 = vadd.xlane.f32.xlu0 %v1056
        %v1058 = vpop.xlane.xlu0 %1057
        %v1059 = vsel %vm847, %v1055, 0.0
        %1060 = vadd.xlane.f32.xlu0 %v1059
        %v1061 = vpop.xlane.xlu0 %1060
        %v1062 = vrcp.pop %v1058
        %v1063 = vmul.f32 %v1053, %v1062
        %v1064 = vrcp.pop %v1061
        %v1065 = vmul.f32 %v1055, %v1064
        %1068 = vrot.lane.b32.xlu0 %v747, 120
        %v1069 = vpop.permute.xlu0 %1068
        %1070 = vrot.lane.b32.xlu0 %v752, 120
        %v1071 = vpop.permute.xlu0 %1070
        %v1075 = vsel %vm847, %v1063, 0
        %v1078 = vsel %vm847, %v1065, 0
        %1080 = vmatprep.subr.mxu0 0.0
        %1081 = vmatpush1.msra.mxu0 %v1069
        %1082 = vmatprep.subr.mxu0 0.0
        %1083 = vmatpush1.msra.mxu0 %v1071
        %1084 = vmatprep.subr.mxu0 0.0
        %1085 = vmatpush1.msra.mxu0 0.0
        %1086 = vmatprep.subr.mxu0 0.0
        %1087 = vmatpush1.msra.mxu0 0.0
        %1088 = vmatprep.subr.mxu0 0.0
        %1089 = vmatpush1.msra.mxu0 0.0
        %1090 = vmatprep.subr.mxu0 0.0
        %1091 = vmatpush1.msra.mxu0 0.0
        %1092 = vmatprep.subr.mxu0 0.0
        %1093 = vmatpush1.msra.mxu0 0.0
        %1094 = vmatprep.subr.mxu0 0.0
        %1095 = vmatpush1.msra.mxu0 0.0
        %1096 = vmatprep.subr.mxu0 0.0
        %1097 = vmatpush1.msra.mxu0 0.0
        %1098 = vmatprep.subr.mxu0 0.0
        %1099 = vmatpush1.msra.mxu0 0.0
        %1100 = vmatprep.subr.mxu0 0.0
        %1101 = vmatpush1.msra.mxu0 0.0
        %1102 = vmatprep.subr.mxu0 0.0
        %1103 = vmatpush1.msra.mxu0 0.0
        %1104 = vmatprep.subr.mxu0 0.0
        %1105 = vmatpush1.msra.mxu0 0.0
        %1106 = vmatprep.subr.mxu0 0.0
        %1107 = vmatpush1.msra.mxu0 0.0
        %1108 = vmatprep.subr.mxu0 0.0
        %1109 = vmatpush1.msra.mxu0 0.0
        %1110 = vmatprep.subr.mxu0 0.0
        %1111 = vmatpush1.msra.mxu0 0.0
        %1112 = vmatprep.subr.mxu0 0.0
        %1113 = vmatpush1.msra.mxu0 0.0
        %1114 = vmatprep.subr.mxu0 0.0
        %1115 = vmatpush1.msra.mxu0 0.0
        %1116 = vmatprep.subr.mxu0 0.0
        %1117 = vmatpush1.msra.mxu0 0.0
        %1118 = vmatprep.subr.mxu0 0.0
        %1119 = vmatpush1.msra.mxu0 0.0
        %1120 = vmatprep.subr.mxu0 0.0
        %1121 = vmatpush1.msra.mxu0 0.0
        %1122 = vmatprep.subr.mxu0 0.0
        %1123 = vmatpush1.msra.mxu0 0.0
        %1124 = vmatprep.subr.mxu0 0.0
        %1125 = vmatpush1.msra.mxu0 0.0
        %1126 = vmatprep.subr.mxu0 0.0
        %1127 = vmatpush1.msra.mxu0 0.0
        %1128 = vmatprep.subr.mxu0 0.0
        %1129 = vmatpush1.msra.mxu0 0.0
        %1130 = vmatprep.subr.mxu0 0.0
        %1131 = vmatpush1.msra.mxu0 0.0
        %1132 = vmatprep.subr.mxu0 0.0
        %1133 = vmatpush1.msra.mxu0 0.0
        %1134 = vmatprep.subr.mxu0 0.0
        %1135 = vmatpush1.msra.mxu0 0.0
        %1136 = vmatprep.subr.mxu0 0.0
        %1137 = vmatpush1.msra.mxu0 0.0
        %1138 = vmatprep.subr.mxu0 0.0
        %1139 = vmatpush1.msra.mxu0 0.0
        %1140 = vmatprep.subr.mxu0 0.0
        %1141 = vmatpush1.msra.mxu0 0.0
        %1142 = vmatprep.subr.mxu0 0.0
        %1143 = vmatpush1.msra.mxu0 0.0
        %1144 = vmatprep.mubr.f32.mxu0 0.0
        %1145 = vmatmul.mubr.f32.gmra.mrb[0].mxu0 %v1075
        %v1146 = vpop.f32.mrb[0].mxu0
        %v1147 = vadd.f32 0.0, %v1146
        %v1148 = vpop.f32.mrb[0].mxu0
        %1149 = vmatprep.mubr.f32.mxu0 0.0
        %1150 = vmatmul.mubr.f32.gmra.mrb[0].mxu0 %v1078
        %v1151 = vpop.f32.mrb[0].mxu0
        %v1152 = vadd.f32 0.0, %v1151
        %v1153 = vpop.f32.mrb[0].mxu0
        %1154 = vdwg.mxu0
        %1155 = vrot.lane.b32.xlu0 %v655, 112
        %v1156 = vpop.permute.xlu0 %1155
        %1157 = vrot.lane.b32.xlu0 %v660, 112
        %v1158 = vpop.permute.xlu0 %1157
        %1159 = vrot.lane.b32.xlu0 %v655, 80
        %v1160 = vpop.permute.xlu0 %1159
        %1161 = vrot.lane.b32.xlu0 %v660, 80
        %v1162 = vpop.permute.xlu0 %1161
        %v1163 = vsel %vm761, %v1156, 0
        %v1165 = vsel %vm761, %v1158, 0
        %v1167 = vsel %vm761, %v1160, 0
        %v1169 = vsel %vm761, %v1162, 0
        %1171 = vmatprep.subr.mxu0 0.0
        %1172 = vmatpush1.xpose.msra.mxu0 %v1167
        %1173 = vmatprep.subr.mxu0 0.0
        %1174 = vmatpush1.xpose.msra.mxu0 %v1169
        %1175 = vmatprep.subr.mxu0 0.0
        %1176 = vmatpush1.xpose.msra.mxu0 0.0
        %1177 = vmatprep.subr.mxu0 0.0
        %1178 = vmatpush1.xpose.msra.mxu0 0.0
        %1179 = vmatprep.subr.mxu0 0.0
        %1180 = vmatpush1.xpose.msra.mxu0 0.0
        %1181 = vmatprep.subr.mxu0 0.0
        %1182 = vmatpush1.xpose.msra.mxu0 0.0
        %1183 = vmatprep.subr.mxu0 0.0
        %1184 = vmatpush1.xpose.msra.mxu0 0.0
        %1185 = vmatprep.subr.mxu0 0.0
        %1186 = vmatpush1.xpose.msra.mxu0 0.0
        %1187 = vmatprep.subr.mxu0 0.0
        %1188 = vmatpush1.xpose.msra.mxu0 0.0
        %1189 = vmatprep.subr.mxu0 0.0
        %1190 = vmatpush1.xpose.msra.mxu0 0.0
        %1191 = vmatprep.subr.mxu0 0.0
        %1192 = vmatpush1.xpose.msra.mxu0 0.0
        %1193 = vmatprep.subr.mxu0 0.0
        %1194 = vmatpush1.xpose.msra.mxu0 0.0
        %1195 = vmatprep.subr.mxu0 0.0
        %1196 = vmatpush1.xpose.msra.mxu0 0.0
        %1197 = vmatprep.subr.mxu0 0.0
        %1198 = vmatpush1.xpose.msra.mxu0 0.0
        %1199 = vmatprep.subr.mxu0 0.0
        %1200 = vmatpush1.xpose.msra.mxu0 0.0
        %1201 = vmatprep.subr.mxu0 0.0
        %1202 = vmatpush1.xpose.msra.mxu0 0.0
        %1203 = vmatprep.subr.mxu0 0.0
        %1204 = vmatpush1.xpose.msra.mxu0 0.0
        %1205 = vmatprep.subr.mxu0 0.0
        %1206 = vmatpush1.xpose.msra.mxu0 0.0
        %1207 = vmatprep.subr.mxu0 0.0
        %1208 = vmatpush1.xpose.msra.mxu0 0.0
        %1209 = vmatprep.subr.mxu0 0.0
        %1210 = vmatpush1.xpose.msra.mxu0 0.0
        %1211 = vmatprep.subr.mxu0 0.0
        %1212 = vmatpush1.xpose.msra.mxu0 0.0
        %1213 = vmatprep.subr.mxu0 0.0
        %1214 = vmatpush1.xpose.msra.mxu0 0.0
        %1215 = vmatprep.subr.mxu0 0.0
        %1216 = vmatpush1.xpose.msra.mxu0 0.0
        %1217 = vmatprep.subr.mxu0 0.0
        %1218 = vmatpush1.xpose.msra.mxu0 0.0
        %1219 = vmatprep.subr.mxu0 0.0
        %1220 = vmatpush1.xpose.msra.mxu0 0.0
        %1221 = vmatprep.subr.mxu0 0.0
        %1222 = vmatpush1.xpose.msra.mxu0 0.0
        %1223 = vmatprep.subr.mxu0 0.0
        %1224 = vmatpush1.xpose.msra.mxu0 0.0
        %1225 = vmatprep.subr.mxu0 0.0
        %1226 = vmatpush1.xpose.msra.mxu0 0.0
        %1227 = vmatprep.subr.mxu0 0.0
        %1228 = vmatpush1.xpose.msra.mxu0 0.0
        %1229 = vmatprep.subr.mxu0 0.0
        %1230 = vmatpush1.xpose.msra.mxu0 0.0
        %1231 = vmatprep.subr.mxu0 0.0
        %1232 = vmatpush1.xpose.msra.mxu0 0.0
        %1233 = vmatprep.subr.mxu0 0.0
        %1234 = vmatpush1.xpose.msra.mxu0 0.0
        %1235 = vmatprep.mubr.f32.mxu0 0.0
        %1236 = vmatmul.mubr.f32.gmra.mrb[0].mxu0 %v1163
        %v1237 = vpop.f32.mrb[0].mxu0
        %v1238 = vadd.f32 0.0, %v1237
        %v1239 = vpop.f32.mrb[0].mxu0
        %1240 = vmatprep.mubr.f32.mxu0 0.0
        %1241 = vmatmul.mubr.f32.gmra.mrb[0].mxu0 %v1165
        %v1242 = vpop.f32.mrb[0].mxu0
        %v1243 = vadd.f32 0.0, %v1242
        %v1244 = vpop.f32.mrb[0].mxu0
        %1245 = vdwg.mxu0
        %v1246 = vmul.f32 %v1238, 0.35355338
        %v1247 = vmul.f32 %v1243, 0.35355338
        %v1248 = vsel %vm847, %v1246, -inf
        %1249 = vmax.xlane.f32.xlu0 %v1248
        %v1250 = vpop.xlane.xlu0 %1249
        %v1251 = vsel %vm847, %v1247, -inf
        %1252 = vmax.xlane.f32.xlu0 %v1251
        %v1253 = vpop.xlane.xlu0 %1252
        %v1254 = vsub.f32 %v1246, %v1250
        %v1255 = vsub.f32 %v1247, %v1253
        %v1256 = vmul.f32 %v1254, 1.442695
        %v1257 = vpow.pop %v1256
        %v1258 = vmul.f32 %v1255, 1.442695
        %v1259 = vpow.pop %v1258
        %v1260 = vsel %vm847, %v1257, 0.0
        %1261 = vadd.xlane.f32.xlu0 %v1260
        %v1262 = vpop.xlane.xlu0 %1261
        %v1263 = vsel %vm847, %v1259, 0.0
        %1264 = vadd.xlane.f32.xlu0 %v1263
        %v1265 = vpop.xlane.xlu0 %1264
        %v1266 = vrcp.pop %v1262
        %v1267 = vmul.f32 %v1257, %v1266
        %v1268 = vrcp.pop %v1265
        %v1269 = vmul.f32 %v1259, %v1268
        %1270 = vrot.lane.b32.xlu0 %v747, 112
        %v1271 = vpop.permute.xlu0 %1270
        %1272 = vrot.lane.b32.xlu0 %v752, 112
        %v1273 = vpop.permute.xlu0 %1272
        %v1277 = vsel %vm847, %v1267, 0
        %v1280 = vsel %vm847, %v1269, 0
        %1282 = vmatprep.subr.mxu0 0.0
        %1283 = vmatpush1.msra.mxu0 %v1271
        %1284 = vmatprep.subr.mxu0 0.0
        %1285 = vmatpush1.msra.mxu0 %v1273
        %1286 = vmatprep.subr.mxu0 0.0
        %1287 = vmatpush1.msra.mxu0 0.0
        %1288 = vmatprep.subr.mxu0 0.0
        %1289 = vmatpush1.msra.mxu0 0.0
        %1290 = vmatprep.subr.mxu0 0.0
        %1291 = vmatpush1.msra.mxu0 0.0
        %1292 = vmatprep.subr.mxu0 0.0
        %1293 = vmatpush1.msra.mxu0 0.0
        %1294 = vmatprep.subr.mxu0 0.0
        %1295 = vmatpush1.msra.mxu0 0.0
        %1296 = vmatprep.subr.mxu0 0.0
        %1297 = vmatpush1.msra.mxu0 0.0
        %1298 = vmatprep.subr.mxu0 0.0
        %1299 = vmatpush1.msra.mxu0 0.0
        %1300 = vmatprep.subr.mxu0 0.0
        %1301 = vmatpush1.msra.mxu0 0.0
        %1302 = vmatprep.subr.mxu0 0.0
        %1303 = vmatpush1.msra.mxu0 0.0
        %1304 = vmatprep.subr.mxu0 0.0
        %1305 = vmatpush1.msra.mxu0 0.0
        %1306 = vmatprep.subr.mxu0 0.0
        %1307 = vmatpush1.msra.mxu0 0.0
        %1308 = vmatprep.subr.mxu0 0.0
        %1309 = vmatpush1.msra.mxu0 0.0
        %1310 = vmatprep.subr.mxu0 0.0
        %1311 = vmatpush1.msra.mxu0 0.0
        %1312 = vmatprep.subr.mxu0 0.0
        %1313 = vmatpush1.msra.mxu0 0.0
        %1314 = vmatprep.subr.mxu0 0.0
        %1315 = vmatpush1.msra.mxu0 0.0
        %1316 = vmatprep.subr.mxu0 0.0
        %1317 = vmatpush1.msra.mxu0 0.0
        %1318 = vmatprep.subr.mxu0 0.0
        %1319 = vmatpush1.msra.mxu0 0.0
        %1320 = vmatprep.subr.mxu0 0.0
        %1321 = vmatpush1.msra.mxu0 0.0
        %1322 = vmatprep.subr.mxu0 0.0
        %1323 = vmatpush1.msra.mxu0 0.0
        %1324 = vmatprep.subr.mxu0 0.0
        %1325 = vmatpush1.msra.mxu0 0.0
        %1326 = vmatprep.subr.mxu0 0.0
        %1327 = vmatpush1.msra.mxu0 0.0
        %1328 = vmatprep.subr.mxu0 0.0
        %1329 = vmatpush1.msra.mxu0 0.0
        %1330 = vmatprep.subr.mxu0 0.0
        %1331 = vmatpush1.msra.mxu0 0.0
        %1332 = vmatprep.subr.mxu0 0.0
        %1333 = vmatpush1.msra.mxu0 0.0
        %1334 = vmatprep.subr.mxu0 0.0
        %1335 = vmatpush1.msra.mxu0 0.0
        %1336 = vmatprep.subr.mxu0 0.0
        %1337 = vmatpush1.msra.mxu0 0.0
        %1338 = vmatprep.subr.mxu0 0.0
        %1339 = vmatpush1.msra.mxu0 0.0
        %1340 = vmatprep.subr.mxu0 0.0
        %1341 = vmatpush1.msra.mxu0 0.0
        %1342 = vmatprep.subr.mxu0 0.0
        %1343 = vmatpush1.msra.mxu0 0.0
        %1344 = vmatprep.subr.mxu0 0.0
        %1345 = vmatpush1.msra.mxu0 0.0
        %1346 = vmatprep.mubr.f32.mxu0 0.0
        %1347 = vmatmul.mubr.f32.gmra.mrb[0].mxu0 %v1277
        %v1348 = vpop.f32.mrb[0].mxu0
        %v1349 = vadd.f32 0.0, %v1348
        %v1350 = vpop.f32.mrb[0].mxu0
        %1351 = vmatprep.mubr.f32.mxu0 0.0
        %1352 = vmatmul.mubr.f32.gmra.mrb[0].mxu0 %v1280
        %v1353 = vpop.f32.mrb[0].mxu0
        %v1354 = vadd.f32 0.0, %v1353
        %v1355 = vpop.f32.mrb[0].mxu0
        %1356 = vdwg.mxu0
        %1357 = vrot.lane.b32.xlu0 %v655, 104
        %v1358 = vpop.permute.xlu0 %1357
        %1359 = vrot.lane.b32.xlu0 %v660, 104
        %v1360 = vpop.permute.xlu0 %1359
        %1361 = vrot.lane.b32.xlu0 %v655, 72
        %v1362 = vpop.permute.xlu0 %1361
        %1363 = vrot.lane.b32.xlu0 %v660, 72
        %v1364 = vpop.permute.xlu0 %1363
        %v1365 = vsel %vm761, %v1358, 0
        %v1367 = vsel %vm761, %v1360, 0
        %v1369 = vsel %vm761, %v1362, 0
        %v1371 = vsel %vm761, %v1364, 0
        %1373 = vmatprep.subr.mxu0 0.0
        %1374 = vmatpush1.xpose.msra.mxu0 %v1369
        %1375 = vmatprep.subr.mxu0 0.0
        %1376 = vmatpush1.xpose.msra.mxu0 %v1371
        %1377 = vmatprep.subr.mxu0 0.0
        %1378 = vmatpush1.xpose.msra.mxu0 0.0
        %1379 = vmatprep.subr.mxu0 0.0
        %1380 = vmatpush1.xpose.msra.mxu0 0.0
        %1381 = vmatprep.subr.mxu0 0.0
        %1382 = vmatpush1.xpose.msra.mxu0 0.0
        %1383 = vmatprep.subr.mxu0 0.0
        %1384 = vmatpush1.xpose.msra.mxu0 0.0
        %1385 = vmatprep.subr.mxu0 0.0
        %1386 = vmatpush1.xpose.msra.mxu0 0.0
        %1387 = vmatprep.subr.mxu0 0.0
        %1388 = vmatpush1.xpose.msra.mxu0 0.0
        %1389 = vmatprep.subr.mxu0 0.0
        %1390 = vmatpush1.xpose.msra.mxu0 0.0
        %1391 = vmatprep.subr.mxu0 0.0
        %1392 = vmatpush1.xpose.msra.mxu0 0.0
        %1393 = vmatprep.subr.mxu0 0.0
        %1394 = vmatpush1.xpose.msra.mxu0 0.0
        %1395 = vmatprep.subr.mxu0 0.0
        %1396 = vmatpush1.xpose.msra.mxu0 0.0
        %1397 = vmatprep.subr.mxu0 0.0
        %1398 = vmatpush1.xpose.msra.mxu0 0.0
        %1399 = vmatprep.subr.mxu0 0.0
        %1400 = vmatpush1.xpose.msra.mxu0 0.0
        %1401 = vmatprep.subr.mxu0 0.0
        %1402 = vmatpush1.xpose.msra.mxu0 0.0
        %1403 = vmatprep.subr.mxu0 0.0
        %1404 = vmatpush1.xpose.msra.mxu0 0.0
        %1405 = vmatprep.subr.mxu0 0.0
        %1406 = vmatpush1.xpose.msra.mxu0 0.0
        %1407 = vmatprep.subr.mxu0 0.0
        %1408 = vmatpush1.xpose.msra.mxu0 0.0
        %1409 = vmatprep.subr.mxu0 0.0
        %1410 = vmatpush1.xpose.msra.mxu0 0.0
        %1411 = vmatprep.subr.mxu0 0.0
        %1412 = vmatpush1.xpose.msra.mxu0 0.0
        %1413 = vmatprep.subr.mxu0 0.0
        %1414 = vmatpush1.xpose.msra.mxu0 0.0
        %1415 = vmatprep.subr.mxu0 0.0
        %1416 = vmatpush1.xpose.msra.mxu0 0.0
        %1417 = vmatprep.subr.mxu0 0.0
        %1418 = vmatpush1.xpose.msra.mxu0 0.0
        %1419 = vmatprep.subr.mxu0 0.0
        %1420 = vmatpush1.xpose.msra.mxu0 0.0
        %1421 = vmatprep.subr.mxu0 0.0
        %1422 = vmatpush1.xpose.msra.mxu0 0.0
        %1423 = vmatprep.subr.mxu0 0.0
        %1424 = vmatpush1.xpose.msra.mxu0 0.0
        %1425 = vmatprep.subr.mxu0 0.0
        %1426 = vmatpush1.xpose.msra.mxu0 0.0
        %1427 = vmatprep.subr.mxu0 0.0
        %1428 = vmatpush1.xpose.msra.mxu0 0.0
        %1429 = vmatprep.subr.mxu0 0.0
        %1430 = vmatpush1.xpose.msra.mxu0 0.0
        %1431 = vmatprep.subr.mxu0 0.0
        %1432 = vmatpush1.xpose.msra.mxu0 0.0
        %1433 = vmatprep.subr.mxu0 0.0
        %1434 = vmatpush1.xpose.msra.mxu0 0.0
        %1435 = vmatprep.subr.mxu0 0.0
        %1436 = vmatpush1.xpose.msra.mxu0 0.0
        %1437 = vmatprep.mubr.f32.mxu0 0.0
        %1438 = vmatmul.mubr.f32.gmra.mrb[0].mxu0 %v1365
        %v1439 = vpop.f32.mrb[0].mxu0
        %v1440 = vadd.f32 0.0, %v1439
        %v1441 = vpop.f32.mrb[0].mxu0
        %1442 = vmatprep.mubr.f32.mxu0 0.0
        %1443 = vmatmul.mubr.f32.gmra.mrb[0].mxu0 %v1367
        %v1444 = vpop.f32.mrb[0].mxu0
        %v1445 = vadd.f32 0.0, %v1444
        %v1446 = vpop.f32.mrb[0].mxu0
        %1447 = vdwg.mxu0
        %v1448 = vmul.f32 %v1440, 0.35355338
        %v1449 = vmul.f32 %v1445, 0.35355338
        %v1450 = vsel %vm847, %v1448, -inf
        %1451 = vmax.xlane.f32.xlu0 %v1450
        %v1452 = vpop.xlane.xlu0 %1451
        %v1453 = vsel %vm847, %v1449, -inf
        %1454 = vmax.xlane.f32.xlu0 %v1453
        %v1455 = vpop.xlane.xlu0 %1454
        %v1456 = vsub.f32 %v1448, %v1452
        %v1457 = vsub.f32 %v1449, %v1455
        %v1458 = vmul.f32 %v1456, 1.442695
        %v1459 = vpow.pop %v1458
        %v1460 = vmul.f32 %v1457, 1.442695
        %v1461 = vpow.pop %v1460
        %v1462 = vsel %vm847, %v1459, 0.0
        %1463 = vadd.xlane.f32.xlu0 %v1462
        %v1464 = vpop.xlane.xlu0 %1463
        %v1465 = vsel %vm847, %v1461, 0.0
        %1466 = vadd.xlane.f32.xlu0 %v1465
        %v1467 = vpop.xlane.xlu0 %1466
        %v1468 = vrcp.pop %v1464
        %v1469 = vmul.f32 %v1459, %v1468
        %v1470 = vrcp.pop %v1467
        %v1471 = vmul.f32 %v1461, %v1470
        %1472 = vrot.lane.b32.xlu0 %v747, 104
        %v1473 = vpop.permute.xlu0 %1472
        %1474 = vrot.lane.b32.xlu0 %v752, 104
        %v1475 = vpop.permute.xlu0 %1474
        %v1479 = vsel %vm847, %v1469, 0
        %v1482 = vsel %vm847, %v1471, 0
        %1484 = vmatprep.subr.mxu0 0.0
        %1485 = vmatpush1.msra.mxu0 %v1473
        %1486 = vmatprep.subr.mxu0 0.0
        %1487 = vmatpush1.msra.mxu0 %v1475
        %1488 = vmatprep.subr.mxu0 0.0
        %1489 = vmatpush1.msra.mxu0 0.0
        %1490 = vmatprep.subr.mxu0 0.0
        %1491 = vmatpush1.msra.mxu0 0.0
        %1492 = vmatprep.subr.mxu0 0.0
        %1493 = vmatpush1.msra.mxu0 0.0
        %1494 = vmatprep.subr.mxu0 0.0
        %1495 = vmatpush1.msra.mxu0 0.0
        %1496 = vmatprep.subr.mxu0 0.0
        %1497 = vmatpush1.msra.mxu0 0.0
        %1498 = vmatprep.subr.mxu0 0.0
        %1499 = vmatpush1.msra.mxu0 0.0
        %1500 = vmatprep.subr.mxu0 0.0
        %1501 = vmatpush1.msra.mxu0 0.0
        %1502 = vmatprep.subr.mxu0 0.0
        %1503 = vmatpush1.msra.mxu0 0.0
        %1504 = vmatprep.subr.mxu0 0.0
        %1505 = vmatpush1.msra.mxu0 0.0
        %1506 = vmatprep.subr.mxu0 0.0
        %1507 = vmatpush1.msra.mxu0 0.0
        %1508 = vmatprep.subr.mxu0 0.0
        %1509 = vmatpush1.msra.mxu0 0.0
        %1510 = vmatprep.subr.mxu0 0.0
        %1511 = vmatpush1.msra.mxu0 0.0
        %1512 = vmatprep.subr.mxu0 0.0
        %1513 = vmatpush1.msra.mxu0 0.0
        %1514 = vmatprep.subr.mxu0 0.0
        %1515 = vmatpush1.msra.mxu0 0.0
        %1516 = vmatprep.subr.mxu0 0.0
        %1517 = vmatpush1.msra.mxu0 0.0
        %1518 = vmatprep.subr.mxu0 0.0
        %1519 = vmatpush1.msra.mxu0 0.0
        %1520 = vmatprep.subr.mxu0 0.0
        %1521 = vmatpush1.msra.mxu0 0.0
        %1522 = vmatprep.subr.mxu0 0.0
        %1523 = vmatpush1.msra.mxu0 0.0
        %1524 = vmatprep.subr.mxu0 0.0
        %1525 = vmatpush1.msra.mxu0 0.0
        %1526 = vmatprep.subr.mxu0 0.0
        %1527 = vmatpush1.msra.mxu0 0.0
        %1528 = vmatprep.subr.mxu0 0.0
        %1529 = vmatpush1.msra.mxu0 0.0
        %1530 = vmatprep.subr.mxu0 0.0
        %1531 = vmatpush1.msra.mxu0 0.0
        %1532 = vmatprep.subr.mxu0 0.0
        %1533 = vmatpush1.msra.mxu0 0.0
        %1534 = vmatprep.subr.mxu0 0.0
        %1535 = vmatpush1.msra.mxu0 0.0
        %1536 = vmatprep.subr.mxu0 0.0
        %1537 = vmatpush1.msra.mxu0 0.0
        %1538 = vmatprep.subr.mxu0 0.0
        %1539 = vmatpush1.msra.mxu0 0.0
        %1540 = vmatprep.subr.mxu0 0.0
        %1541 = vmatpush1.msra.mxu0 0.0
        %1542 = vmatprep.subr.mxu0 0.0
        %1543 = vmatpush1.msra.mxu0 0.0
        %1544 = vmatprep.subr.mxu0 0.0
        %1545 = vmatpush1.msra.mxu0 0.0
        %1546 = vmatprep.subr.mxu0 0.0
        %1547 = vmatpush1.msra.mxu0 0.0
        %1548 = vmatprep.mubr.f32.mxu0 0.0
        %1549 = vmatmul.mubr.f32.gmra.mrb[0].mxu0 %v1479
        %v1550 = vpop.f32.mrb[0].mxu0
        %v1551 = vadd.f32 0.0, %v1550
        %v1552 = vpop.f32.mrb[0].mxu0
        %1553 = vmatprep.mubr.f32.mxu0 0.0
        %1554 = vmatmul.mubr.f32.gmra.mrb[0].mxu0 %v1482
        %v1555 = vpop.f32.mrb[0].mxu0
        %v1556 = vadd.f32 0.0, %v1555
        %v1557 = vpop.f32.mrb[0].mxu0
        %1558 = vdwg.mxu0
        %1561 = vrot.lane.b32.xlu0 %v1147, 8
        %v1562 = vpop.permute.xlu0 %1561
        %1563 = vrot.lane.b32.xlu0 %v1152, 8
        %v1564 = vpop.permute.xlu0 %1563
        %1569 = vrot.lane.b32.xlu0 %v1349, 16
        %v1570 = vpop.permute.xlu0 %1569
        %1571 = vrot.lane.b32.xlu0 %v1354, 16
        %v1572 = vpop.permute.xlu0 %1571
        %1577 = vrot.lane.b32.xlu0 %v1551, 24
        %v1578 = vpop.permute.xlu0 %1577
        %1579 = vrot.lane.b32.xlu0 %v1556, 24
        %v1580 = vpop.permute.xlu0 %1579
        %v1583 = vsel %vm761, %v943, %v1562
        %v1584 = vsel %vm761, %v948, %v1564
        %v1585 = vsel %vm847, %v1583, %v1570
        %v1586 = vsel %vm847, %v1584, %v1572
        %vm1587 = vcmask 195584
        %v1588 = vsel %vm1587, %v1585, %v1578
        %v1589 = vsel %vm1587, %v1586, %v1580
        %v1590 = vld [vmem:[#allocation5] sm:$0xff]
        %v1591 = vld [vmem:[#allocation5 + $0x8] sm:$0xff]
        %v1592 = vld [vmem:[#allocation5 + $0x10] sm:$0xff]
        %v1593 = vld [vmem:[#allocation5 + $0x18] sm:$0xff]
        %v1594 = vld [vmem:[%s7] sm:$0x1]
        %v1596 = vlaneseq
        %v1597 = vshrl.u32 %v1596, 7
        %v1598 = vsub.s32 0, %v1597
        %v1599 = vrot.slane %v1594, %v1598
        %v1602 = vsel %vm581, %v1588, 0
        %v1605 = vsel %vm581, %v1589, 0
        %1607 = vmatprep.subr.mxu0 0.0
        %1608 = vmatpush1.msra.mxu0 %v1590
        %1609 = vmatprep.subr.mxu0 0.0
        %1610 = vmatpush1.msra.mxu0 %v1591
        %1611 = vmatprep.subr.mxu0 0.0
        %1612 = vmatpush1.msra.mxu0 %v1592
        %1613 = vmatprep.subr.mxu0 0.0
        %1614 = vmatpush1.msra.mxu0 %v1593
        %1615 = vmatprep.subr.mxu0 0.0
        %1616 = vmatpush1.msra.mxu0 0.0
        %1617 = vmatprep.subr.mxu0 0.0
        %1618 = vmatpush1.msra.mxu0 0.0
        %1619 = vmatprep.subr.mxu0 0.0
        %1620 = vmatpush1.msra.mxu0 0.0
        %1621 = vmatprep.subr.mxu0 0.0
        %1622 = vmatpush1.msra.mxu0 0.0
        %1623 = vmatprep.subr.mxu0 0.0
        %1624 = vmatpush1.msra.mxu0 0.0
        %1625 = vmatprep.subr.mxu0 0.0
        %1626 = vmatpush1.msra.mxu0 0.0
        %1627 = vmatprep.subr.mxu0 0.0
        %1628 = vmatpush1.msra.mxu0 0.0
        %1629 = vmatprep.subr.mxu0 0.0
        %1630 = vmatpush1.msra.mxu0 0.0
        %1631 = vmatprep.subr.mxu0 0.0
        %1632 = vmatpush1.msra.mxu0 0.0
        %1633 = vmatprep.subr.mxu0 0.0
        %1634 = vmatpush1.msra.mxu0 0.0
        %1635 = vmatprep.subr.mxu0 0.0
        %1636 = vmatpush1.msra.mxu0 0.0
        %1637 = vmatprep.subr.mxu0 0.0
        %1638 = vmatpush1.msra.mxu0 0.0
        %1639 = vmatprep.subr.mxu0 0.0
        %1640 = vmatpush1.msra.mxu0 0.0
        %1641 = vmatprep.subr.mxu0 0.0
        %1642 = vmatpush1.msra.mxu0 0.0
        %1643 = vmatprep.subr.mxu0 0.0
        %1644 = vmatpush1.msra.mxu0 0.0
        %1645 = vmatprep.subr.mxu0 0.0
        %1646 = vmatpush1.msra.mxu0 0.0
        %1647 = vmatprep.subr.mxu0 0.0
        %1648 = vmatpush1.msra.mxu0 0.0
        %1649 = vmatprep.subr.mxu0 0.0
        %1650 = vmatpush1.msra.mxu0 0.0
        %1651 = vmatprep.subr.mxu0 0.0
        %1652 = vmatpush1.msra.mxu0 0.0
        %1653 = vmatprep.subr.mxu0 0.0
        %1654 = vmatpush1.msra.mxu0 0.0
        %1655 = vmatprep.subr.mxu0 0.0
        %1656 = vmatpush1.msra.mxu0 0.0
        %1657 = vmatprep.subr.mxu0 0.0
        %1658 = vmatpush1.msra.mxu0 0.0
        %1659 = vmatprep.subr.mxu0 0.0
        %1660 = vmatpush1.msra.mxu0 0.0
        %1661 = vmatprep.subr.mxu0 0.0
        %1662 = vmatpush1.msra.mxu0 0.0
        %1663 = vmatprep.subr.mxu0 0.0
        %1664 = vmatpush1.msra.mxu0 0.0
        %1665 = vmatprep.subr.mxu0 0.0
        %1666 = vmatpush1.msra.mxu0 0.0
        %1667 = vmatprep.subr.mxu0 0.0
        %1668 = vmatpush1.msra.mxu0 0.0
        %1669 = vmatprep.subr.mxu0 0.0
        %1670 = vmatpush1.msra.mxu0 0.0
        %1671 = vmatprep.mubr.f32.mxu0 0.0
        %1672 = vmatmul.mubr.f32.gmra.mrb[0].mxu0 %v1602
        %v1673 = vpop.f32.mrb[0].mxu0
        %v1674 = vadd.f32 %v1599, %v1673
        %v1675 = vpop.f32.mrb[0].mxu0
        %1676 = vmatprep.mubr.f32.mxu0 0.0
        %1677 = vmatmul.mubr.f32.gmra.mrb[0].mxu0 %v1605
        %v1678 = vpop.f32.mrb[0].mxu0
        %v1679 = vadd.f32 %v1599, %v1678
        %v1680 = vpop.f32.mrb[0].mxu0
        %1681 = vdwg.mxu0
        %v1682 = vadd.f32 %v564, %v1674
        %v1683 = vadd.f32 %v565, %v1679
        %v1684 = vld [vmem:[%s8] sm:$0x1]
        %v1685 = vld [vmem:[%s9] sm:$0x1]
        %v1686 = vsel %vm581, %v1682, 0.0
        %1687 = vadd.xlane.f32.xlu0 %v1686
        %v1688 = vpop.xlane.xlu0 %1687
        %v1689 = vsel %vm581, %v1683, 0.0
        %1690 = vadd.xlane.f32.xlu0 %v1689
        %v1691 = vpop.xlane.xlu0 %1690
        %v1692 = vrcp.pop 32.0
        %v1693 = vmul.f32 %v1688, %v1692
        %v1694 = vmul.f32 %v1691, %v1692
        %v1695 = vsub.f32 %v1682, %v1693
        %v1696 = vsub.f32 %v1683, %v1694
        %v1697 = vmul.f32 %v1695, %v1695
        %v1698 = vmul.f32 %v1696, %v1696
        %v1699 = vsel %vm581, %v1697, 0.0
        %1700 = vadd.xlane.f32.xlu0 %v1699
        %v1701 = vpop.xlane.xlu0 %1700
        %v1702 = vsel %vm581, %v1698, 0.0
        %1703 = vadd.xlane.f32.xlu0 %v1702
        %v1704 = vpop.xlane.xlu0 %1703
        %v1705 = vmul.f32 %v1701, %v1692
        %v1706 = vmul.f32 %v1704, %v1692
        %v1707 = vadd.f32 %v1705, 1e-05
        %v1708 = vadd.f32 %v1706, 1e-05
        %v1709 = vrsqrt.pop %v1707
        %v1710 = vrsqrt.pop %v1708
        %v1711 = vmul.f32 %v1695, %v1709
        %v1712 = vmul.f32 %v1696, %v1710
        %v1714 = vlaneseq
        %v1715 = vshrl.u32 %v1714, 7
        %v1716 = vsub.s32 0, %v1715
        %v1717 = vrot.slane %v1684, %v1716
        %v1719 = vmul.f32 %v1711, %v1717
        %v1720 = vmul.f32 %v1712, %v1717
        %v1722 = vlaneseq
        %v1723 = vshrl.u32 %v1722, 7
        %v1724 = vsub.s32 0, %v1723
        %v1725 = vrot.slane %v1685, %v1724
        %v1727 = vadd.f32 %v1719, %v1725
        %v1728 = vadd.f32 %v1720, %v1725
        %v1729 = vld [vmem:[#allocation7] sm:$0xff]
        %v1730 = vld [vmem:[#allocation7 + $0x8] sm:$0xff]
        %v1731 = vld [vmem:[#allocation7 + $0x10] sm:$0xff]
        %v1732 = vld [vmem:[#allocation7 + $0x18] sm:$0xff]
        %v1733 = vld [vmem:[%s11] sm:$0x1]
        %v1735 = vlaneseq
        %v1736 = vshrl.u32 %v1735, 7
        %v1737 = vsub.s32 0, %v1736
        %v1738 = vrot.slane %v1733, %v1737
        %v1741 = vsel %vm581, %v1727, 0
        %v1744 = vsel %vm581, %v1728, 0
        %1746 = vmatprep.subr.mxu0 0.0
        %1747 = vmatpush1.msra.mxu0 %v1729
        %1748 = vmatprep.subr.mxu0 0.0
        %1749 = vmatpush1.msra.mxu0 %v1730
        %1750 = vmatprep.subr.mxu0 0.0
        %1751 = vmatpush1.msra.mxu0 %v1731
        %1752 = vmatprep.subr.mxu0 0.0
        %1753 = vmatpush1.msra.mxu0 %v1732
        %1754 = vmatprep.subr.mxu0 0.0
        %1755 = vmatpush1.msra.mxu0 0.0
        %1756 = vmatprep.subr.mxu0 0.0
        %1757 = vmatpush1.msra.mxu0 0.0
        %1758 = vmatprep.subr.mxu0 0.0
        %1759 = vmatpush1.msra.mxu0 0.0
        %1760 = vmatprep.subr.mxu0 0.0
        %1761 = vmatpush1.msra.mxu0 0.0
        %1762 = vmatprep.subr.mxu0 0.0
        %1763 = vmatpush1.msra.mxu0 0.0
        %1764 = vmatprep.subr.mxu0 0.0
        %1765 = vmatpush1.msra.mxu0 0.0
        %1766 = vmatprep.subr.mxu0 0.0
        %1767 = vmatpush1.msra.mxu0 0.0
        %1768 = vmatprep.subr.mxu0 0.0
        %1769 = vmatpush1.msra.mxu0 0.0
        %1770 = vmatprep.subr.mxu0 0.0
        %1771 = vmatpush1.msra.mxu0 0.0
        %1772 = vmatprep.subr.mxu0 0.0
        %1773 = vmatpush1.msra.mxu0 0.0
        %1774 = vmatprep.subr.mxu0 0.0
        %1775 = vmatpush1.msra.mxu0 0.0
        %1776 = vmatprep.subr.mxu0 0.0
        %1777 = vmatpush1.msra.mxu0 0.0
        %1778 = vmatprep.subr.mxu0 0.0
        %1779 = vmatpush1.msra.mxu0 0.0
        %1780 = vmatprep.subr.mxu0 0.0
        %1781 = vmatpush1.msra.mxu0 0.0
        %1782 = vmatprep.subr.mxu0 0.0
        %1783 = vmatpush1.msra.mxu0 0.0
        %1784 = vmatprep.subr.mxu0 0.0
        %1785 = vmatpush1.msra.mxu0 0.0
        %1786 = vmatprep.subr.mxu0 0.0
        %1787 = vmatpush1.msra.mxu0 0.0
        %1788 = vmatprep.subr.mxu0 0.0
        %1789 = vmatpush1.msra.mxu0 0.0
        %1790 = vmatprep.subr.mxu0 0.0
        %1791 = vmatpush1.msra.mxu0 0.0
        %1792 = vmatprep.subr.mxu0 0.0
        %1793 = vmatpush1.msra.mxu0 0.0
        %1794 = vmatprep.subr.mxu0 0.0
        %1795 = vmatpush1.msra.mxu0 0.0
        %1796 = vmatprep.subr.mxu0 0.0
        %1797 = vmatpush1.msra.mxu0 0.0
        %1798 = vmatprep.subr.mxu0 0.0
        %1799 = vmatpush1.msra.mxu0 0.0
        %1800 = vmatprep.subr.mxu0 0.0
        %1801 = vmatpush1.msra.mxu0 0.0
        %1802 = vmatprep.subr.mxu0 0.0
        %1803 = vmatpush1.msra.mxu0 0.0
        %1804 = vmatprep.subr.mxu0 0.0
        %1805 = vmatpush1.msra.mxu0 0.0
        %1806 = vmatprep.subr.mxu0 0.0
        %1807 = vmatpush1.msra.mxu0 0.0
        %1808 = vmatprep.subr.mxu0 0.0
        %1809 = vmatpush1.msra.mxu0 0.0
        %1810 = vmatprep.mubr.f32.mxu0 0.0
        %1811 = vmatmul.mubr.f32.gmra.mrb[0].mxu0 %v1741
        %v1812 = vpop.f32.mrb[0].mxu0
        %v1813 = vadd.f32 %v1738, %v1812
        %v1814 = vpop.f32.mrb[0].mxu0
        %1815 = vmatprep.mubr.f32.mxu0 0.0
        %1816 = vmatmul.mubr.f32.gmra.mrb[0].mxu0 %v1744
        %v1817 = vpop.f32.mrb[0].mxu0
        %v1818 = vadd.f32 %v1738, %v1817
        %v1819 = vpop.f32.mrb[0].mxu0
        %1820 = vdwg.mxu0
        %v1821 = vmax.f32 %v1813, 0.0
        %v1822 = vmax.f32 %v1818, 0.0
        %v1823 = vld [vmem:[%s12] sm:$0xff]
        %v1824 = vld [vmem:[%s12 + $0x8] sm:$0xff]
        %v1825 = vld [vmem:[%s12 + $0x10] sm:$0xff]
        %v1826 = vld [vmem:[%s12 + $0x18] sm:$0xff]
        %v1827 = vld [vmem:[%s12 + $0x20] sm:$0xff]
        %v1828 = vld [vmem:[%s12 + $0x28] sm:$0xff]
        %v1829 = vld [vmem:[%s12 + $0x30] sm:$0xff]
        %v1830 = vld [vmem:[%s12 + $0x38] sm:$0xff]
        %v1831 = vld [vmem:[%s13] sm:$0x1]
        %v1833 = vlaneseq
        %v1834 = vshrl.u32 %v1833, 7
        %v1835 = vsub.s32 0, %v1834
        %v1836 = vrot.slane %v1831, %v1835
        %vm1838 = vcmask 523264
        %v1840 = vsel %vm1838, %v1821, 0
        %v1843 = vsel %vm1838, %v1822, 0
        %1845 = vmatprep.subr.mxu0 0.0
        %1846 = vmatpush1.msra.mxu0 %v1823
        %1847 = vmatprep.subr.mxu0 0.0
        %1848 = vmatpush1.msra.mxu0 %v1824
        %1849 = vmatprep.subr.mxu0 0.0
        %1850 = vmatpush1.msra.mxu0 %v1825
        %1851 = vmatprep.subr.mxu0 0.0
        %1852 = vmatpush1.msra.mxu0 %v1826
        %1853 = vmatprep.subr.mxu0 0.0
        %1854 = vmatpush1.msra.mxu0 %v1827
        %1855 = vmatprep.subr.mxu0 0.0
        %1856 = vmatpush1.msra.mxu0 %v1828
        %1857 = vmatprep.subr.mxu0 0.0
        %1858 = vmatpush1.msra.mxu0 %v1829
        %1859 = vmatprep.subr.mxu0 0.0
        %1860 = vmatpush1.msra.mxu0 %v1830
        %1861 = vmatprep.subr.mxu0 0.0
        %1862 = vmatpush1.msra.mxu0 0.0
        %1863 = vmatprep.subr.mxu0 0.0
        %1864 = vmatpush1.msra.mxu0 0.0
        %1865 = vmatprep.subr.mxu0 0.0
        %1866 = vmatpush1.msra.mxu0 0.0
        %1867 = vmatprep.subr.mxu0 0.0
        %1868 = vmatpush1.msra.mxu0 0.0
        %1869 = vmatprep.subr.mxu0 0.0
        %1870 = vmatpush1.msra.mxu0 0.0
        %1871 = vmatprep.subr.mxu0 0.0
        %1872 = vmatpush1.msra.mxu0 0.0
        %1873 = vmatprep.subr.mxu0 0.0
        %1874 = vmatpush1.msra.mxu0 0.0
        %1875 = vmatprep.subr.mxu0 0.0
        %1876 = vmatpush1.msra.mxu0 0.0
        %1877 = vmatprep.subr.mxu0 0.0
        %1878 = vmatpush1.msra.mxu0 0.0
        %1879 = vmatprep.subr.mxu0 0.0
        %1880 = vmatpush1.msra.mxu0 0.0
        %1881 = vmatprep.subr.mxu0 0.0
        %1882 = vmatpush1.msra.mxu0 0.0
        %1883 = vmatprep.subr.mxu0 0.0
        %1884 = vmatpush1.msra.mxu0 0.0
        %1885 = vmatprep.subr.mxu0 0.0
        %1886 = vmatpush1.msra.mxu0 0.0
        %1887 = vmatprep.subr.mxu0 0.0
        %1888 = vmatpush1.msra.mxu0 0.0
        %1889 = vmatprep.subr.mxu0 0.0
        %1890 = vmatpush1.msra.mxu0 0.0
        %1891 = vmatprep.subr.mxu0 0.0
        %1892 = vmatpush1.msra.mxu0 0.0
        %1893 = vmatprep.subr.mxu0 0.0
        %1894 = vmatpush1.msra.mxu0 0.0
        %1895 = vmatprep.subr.mxu0 0.0
        %1896 = vmatpush1.msra.mxu0 0.0
        %1897 = vmatprep.subr.mxu0 0.0
        %1898 = vmatpush1.msra.mxu0 0.0
        %1899 = vmatprep.subr.mxu0 0.0
        %1900 = vmatpush1.msra.mxu0 0.0
        %1901 = vmatprep.subr.mxu0 0.0
        %1902 = vmatpush1.msra.mxu0 0.0
        %1903 = vmatprep.subr.mxu0 0.0
        %1904 = vmatpush1.msra.mxu0 0.0
        %1905 = vmatprep.subr.mxu0 0.0
        %1906 = vmatpush1.msra.mxu0 0.0
        %1907 = vmatprep.subr.mxu0 0.0
        %1908 = vmatpush1.msra.mxu0 0.0
        %1909 = vmatprep.mubr.f32.mxu0 0.0
        %1910 = vmatmul.mubr.f32.gmra.mrb[0].mxu0 %v1840
        %v1911 = vpop.f32.mrb[0].mxu0
        %v1912 = vadd.f32 %v1836, %v1911
        %v1913 = vpop.f32.mrb[0].mxu0
        %1914 = vmatprep.mubr.f32.mxu0 0.0
        %1915 = vmatmul.mubr.f32.gmra.mrb[0].mxu0 %v1843
        %v1916 = vpop.f32.mrb[0].mxu0
        %v1917 = vadd.f32 %v1836, %v1916
        %v1918 = vpop.f32.mrb[0].mxu0
        %1919 = vdwg.mxu0
        %v1920 = vadd.f32 %v1727, %v1912
        %v1921 = vadd.f32 %v1728, %v1917
        %v1922 = vld [vmem:[%s14] sm:$0x1]
        %v1923 = vld [vmem:[%s15] sm:$0x1]
        %v1924 = vsel %vm581, %v1920, 0.0
        %1925 = vadd.xlane.f32.xlu0 %v1924
        %v1926 = vpop.xlane.xlu0 %1925
        %v1927 = vsel %vm581, %v1921, 0.0
        %1928 = vadd.xlane.f32.xlu0 %v1927
        %v1929 = vpop.xlane.xlu0 %1928
        %v1930 = vmul.f32 %v1926, %v1692
        %v1931 = vmul.f32 %v1929, %v1692
        %v1932 = vsub.f32 %v1920, %v1930
        %v1933 = vsub.f32 %v1921, %v1931
        %v1934 = vmul.f32 %v1932, %v1932
        %v1935 = vmul.f32 %v1933, %v1933
        %v1936 = vsel %vm581, %v1934, 0.0
        %1937 = vadd.xlane.f32.xlu0 %v1936
        %v1938 = vpop.xlane.xlu0 %1937
        %v1939 = vsel %vm581, %v1935, 0.0
        %1940 = vadd.xlane.f32.xlu0 %v1939
        %v1941 = vpop.xlane.xlu0 %1940
        %v1942 = vmul.f32 %v1938, %v1692
        %v1943 = vmul.f32 %v1941, %v1692
        %v1944 = vadd.f32 %v1942, 1e-05
        %v1945 = vadd.f32 %v1943, 1e-05
        %v1946 = vrsqrt.pop %v1944
        %v1947 = vrsqrt.pop %v1945
        %v1948 = vmul.f32 %v1932, %v1946
        %v1949 = vmul.f32 %v1933, %v1947
        %v1951 = vlaneseq
        %v1952 = vshrl.u32 %v1951, 7
        %v1953 = vsub.s32 0, %v1952
        %v1954 = vrot.slane %v1922, %v1953
        %v1956 = vmul.f32 %v1948, %v1954
        %v1957 = vmul.f32 %v1949, %v1954
        %v1959 = vlaneseq
        %v1960 = vshrl.u32 %v1959, 7
        %v1961 = vsub.s32 0, %v1960
        %v1962 = vrot.slane %v1923, %v1961
        %v1964 = vadd.f32 %v1956, %v1962
        %v1965 = vadd.f32 %v1957, %v1962
        %1966 = vst.msk [vmem:[%s558] sm:$0xff] %vm581, %v1964
        %1967 = vst.msk [vmem:[%s558 + $0x8] sm:$0xff] %vm581, %v1965
        %s1968 = sand.u32 %s381, 1
        %s1969 = scalar_lea.sflag [#allocation4], %s1968
        %s1970 = sand.u32 %s381, 1
        %s1971 = smul.addr %s1970, 16
        %s1972 = scalar_lea.vmem [#allocation8], %s1971
        // Predicated region
        $region97: #{tpu_custom_call.1} parent=83 // pred_check
          %p1973 = pneg %p391
        $region98: #{tpu_custom_call.1} parent=83 // pred_check_branch
          %1975 = sbr.rel (%p1973) target = $region100
        $region99: #{tpu_custom_call.1} parent=83 // pred_region
          %s1977 = ssub.s32 256, 256
          %1978 = vsyncadd %s1969, %s1977
          %s1979 = smul.addr %s32, 2
          %s1980 = smul.addr %s1979, 128
          %s1981 = scalar_lea.hbm %s16, %s1980
          %s1982 = sshll.u32 %s1972, 4
          %s1983 = int_to_ptr.vmem [resolvable:$true] %s1982
          %1988 = dma.vmem_to_hbm [thread:$0]  %s1983, 256, %s1981, %s1969, 128, 128, 8
        $region100: #{tpu_custom_call.1} parent=83 // pred_fallthru
          _
      $region84: #{tpu_custom_call.1} parent=5 // pred_fallthru
        _
      %p1989 = scmp.le.s32.totalorder 2, %s27
      // Predicated region
      $region101: #{tpu_custom_call.1} parent=5 // pred_check
        %p1990 = pneg %p1989
      $region102: #{tpu_custom_call.1} parent=5 // pred_check_branch
        %1992 = sbr.rel (%p1990) target = $region104
      $region103: #{tpu_custom_call.1} parent=5 // pred_region
        %s1993 = ssub.s32 %s27, 2
        // Predicated region
        $region105: #{tpu_custom_call.1} parent=103 // pred_check
          %p1994 = pneg %p397
        $region106: #{tpu_custom_call.1} parent=103 // pred_check_branch
          %1996 = sbr.rel (%p1994) target = $region108
        $region107: #{tpu_custom_call.1} parent=103 // pred_region
          %s1997 = sand.u32 %s382, 1
          %s1998 = scalar_lea.sflag [#allocation4], %s1997
          %s1999 = sand.u32 %s382, 1
          %s2000 = smul.addr %s1999, 16
          %s2001 = scalar_lea.vmem [#allocation8], %s2000
          %2002 = dma.done %s1998, 256
        $region108: #{tpu_custom_call.1} parent=103 // pred_fallthru
          _
      $region104: #{tpu_custom_call.1} parent=5 // pred_fallthru
        _
    $region6: #{tpu_custom_call.1} parent=1 // loop_footer
      %s31 = sadd.s32 1, %s27
    $region7: #{tpu_custom_call.1} parent=1 // loop_footer_branch
      %26 = sbr.rel target = $region3
    $region8: #{tpu_custom_call.1} parent=1 // loop_exit
      _
    %2003 = vsyncpa [#allocation3], 1
    %s2004 = scalar_lea.sflag [#allocation3], 1
    %2005 = vsyncpa %s2004, 1
    %2006 = vsyncpa [#allocation6], 1
    %2007 = vsyncpa [#allocation4], 1
    %s2008 = scalar_lea.sflag [#allocation4], 1
    %2009 = vsyncpa %s2008, 1

</llo_original>
